<compile_context>
chip_gen: v7x
topology: tpu7x:2x2x1
jax: 0.10.0
libtpu: 0.0.40
codegen_flags: <defaults>
</compile_context>

<pallas_src>
import jax
import jax.numpy as jnp
from jax.experimental import pallas as pl
from jax.experimental.pallas import tpu as pltpu

INPUT_SIZE = 3 * 32 * 32     # 3072
HIDDEN = (120, 84)
OUTPUT_SIZE = 10

# Lane-aligned (padded) dims used inside the kernel.
H1P = 128
H2P = 128
OUTP = 128


def _round_up(n, m):
    return ((n + m - 1) // m) * m


def _mlp_kernel(x_ref, w1_ref, b1_ref, w2_ref, b2_ref, w3_ref, b3_ref, o_ref):
    # x arrives as f32 (single HBM pass); cast to bf16 on-chip for the MXU.
    # Accumulation and bias + ReLU epilogue in f32.
    x = x_ref[...].astype(jnp.bfloat16)                              # (TB, 3072)
    h1 = jnp.dot(x, w1_ref[...], preferred_element_type=jnp.float32)
    h1 = jnp.maximum(h1 + b1_ref[...], 0.0)                          # (TB, 128) f32

    h2 = jnp.dot(h1.astype(jnp.bfloat16), w2_ref[...],
                 preferred_element_type=jnp.float32)
    h2 = jnp.maximum(h2 + b2_ref[...], 0.0)                          # (TB, 128) f32

    y = jnp.dot(h2.astype(jnp.bfloat16), w3_ref[...],
                preferred_element_type=jnp.float32)
    o_ref[...] = (y + b3_ref[...]).astype(o_ref.dtype)               # (TB, 128) bf16


def _pad2(a, rows, cols):
    return jnp.pad(a, ((0, rows - a.shape[0]), (0, cols - a.shape[1])))


def boringnet_forward(x_nchw, params, *, tb_max=512):
    """x_nchw: (B, 3, 32, 32) float32 -> logits (B, 10) float32.

    params = (w1, b1, w2, b2, w3, b3), weights in (in, out) layout
    (transpose PyTorch nn.Linear weights, which are stored (out, in)).
    """
    w1, b1, w2, b2, w3, b3 = params
    B = x_nchw.shape[0]
    x_flat = x_nchw.reshape(B, -1)            # nn.Flatten on NCHW; stays f32, no copy

    # --- batch tiling: sublane-aligned tile; ragged last tile handled by the
    #     Pallas pipeline (no jnp.pad / extra HBM pass over x).
    TB = min(tb_max, _round_up(B, 16))        # 16 = bf16 sublane packing
    num_tiles = pl.cdiv(B, TB)
    if num_tiles < 2 and B >= 32:
        # v7x has 2 TensorCores: make the "parallel" batch axis actually split.
        TB = _round_up(pl.cdiv(B, 2), 16)
        num_tiles = pl.cdiv(B, TB)
    grid = (num_tiles,)
    B_pad = num_tiles * TB

    # --- weights: zero-padded to lane-aligned widths, bf16, resident in VMEM.
    w1p = _pad2(w1, INPUT_SIZE, H1P).astype(jnp.bfloat16)
    w2p = _pad2(w2, H1P, H2P).astype(jnp.bfloat16)
    w3p = _pad2(w3, H2P, OUTP).astype(jnp.bfloat16)
    b1p = _pad2(b1, 1, H1P).astype(jnp.float32)   # padded bias cols are exactly 0
    b2p = _pad2(b2, 1, H2P).astype(jnp.float32)
    b3p = _pad2(b3, 1, OUTP).astype(jnp.float32)

    flops = 2 * B_pad * (INPUT_SIZE * H1P + H1P * H2P + H2P * OUTP)
    bytes_accessed = (
        B * INPUT_SIZE * 4                                        # x (f32, streamed)
        + (INPUT_SIZE * H1P + H1P * H2P + H2P * OUTP) * 2         # weights (bf16)
        + (H1P + H2P + OUTP) * 4                                  # biases (f32)
        + B_pad * OUTP * 2                                        # output (bf16)
    )

    out_padded = pl.pallas_call(
        _mlp_kernel,
        out_shape=jax.ShapeDtypeStruct((B_pad, OUTP), jnp.bfloat16),
        grid=grid,
        in_specs=[
            pl.BlockSpec((TB, INPUT_SIZE), lambda i: (i, 0)),     # x: streamed (f32)
            pl.BlockSpec((INPUT_SIZE, H1P), lambda i: (0, 0)),    # weights: resident
            pl.BlockSpec((1, H1P), lambda i: (0, 0)),
            pl.BlockSpec((H1P, H2P), lambda i: (0, 0)),
            pl.BlockSpec((1, H2P), lambda i: (0, 0)),
            pl.BlockSpec((H2P, OUTP), lambda i: (0, 0)),
            pl.BlockSpec((1, OUTP), lambda i: (0, 0)),
        ],
        out_specs=pl.BlockSpec((TB, OUTP), lambda i: (i, 0)),
        compiler_params=pltpu.CompilerParams(
            dimension_semantics=("parallel",),
            vmem_limit_bytes=32 * 1024 * 1024),
        cost_estimate=pl.CostEstimate(
            flops=flops, transcendentals=0, bytes_accessed=bytes_accessed),
    )(x_flat, w1p, b1p, w2p, b2p, w3p, b3p)

    # Rows past B (ragged tile) and columns past 10 (lane padding) are garbage;
    # every op is row-wise, so valid rows are unaffected. Slice them off.
    return out_padded[:B, :OUTPUT_SIZE].astype(jnp.float32)


def init_params(key):
    """Deterministic init matching PyTorch nn.Linear default:
    U(-1/sqrt(fan_in), 1/sqrt(fan_in)) for both weight and bias.
    Weights are produced directly in (in, out) layout."""
    dims = [(INPUT_SIZE, HIDDEN[0]), (HIDDEN[0], HIDDEN[1]), (HIDDEN[1], OUTPUT_SIZE)]
    params = []
    keys = jax.random.split(key, 2 * len(dims))
    for i, (fan_in, fan_out) in enumerate(dims):
        bound = 1.0 / (fan_in ** 0.5)
        w = jax.random.uniform(keys[2 * i], (fan_in, fan_out),
                               minval=-bound, maxval=bound, dtype=jnp.float32)
        b = jax.random.uniform(keys[2 * i + 1], (1, fan_out),
                               minval=-bound, maxval=bound, dtype=jnp.float32)
        params += [w, b]
    return tuple(params)


def _reference_forward(x_nchw, params):
    w1, b1, w2, b2, w3, b3 = params
    x = x_nchw.reshape(x_nchw.shape[0], -1)
    h1 = jnp.maximum(x @ w1 + b1, 0.0)
    h2 = jnp.maximum(h1 @ w2 + b2, 0.0)
    return h2 @ w3 + b3


if __name__ == "__main__":
    key = jax.random.PRNGKey(0)
    pkey, xkey = jax.random.split(key)
    params = init_params(pkey)

    # Forward implies CIFAR-like input: (B, 3, 32, 32); small batch B=2.
    x = jax.random.normal(xkey, (2, 3, 32, 32), dtype=jnp.float32)

    out = boringnet_forward(x, params)
    out = jax.block_until_ready(out)

    ref = _reference_forward(x, params)
    assert out.shape == (2, OUTPUT_SIZE)
    # bf16 MXU inputs / bf16 logit store (f32 accumulation) -> loosened
    # tolerance vs the f32 reference.
    assert jnp.allclose(out, ref, atol=5e-2, rtol=5e-2)

    print("KERNEL_OK")
</pallas_src>

<mosaic_0001>
module attributes {stable_mosaic.version = 11 : i64} {
  func.func @_mlp_kernel(%arg0: i32, %arg1: memref<16x3072xf32, #tpu.memory_space<vmem>>, %arg2: memref<3072x128xbf16, #tpu.memory_space<vmem>>, %arg3: memref<1x128xf32, #tpu.memory_space<vmem>>, %arg4: memref<128x128xbf16, #tpu.memory_space<vmem>>, %arg5: memref<1x128xf32, #tpu.memory_space<vmem>>, %arg6: memref<128x128xbf16, #tpu.memory_space<vmem>>, %arg7: memref<1x128xf32, #tpu.memory_space<vmem>>, %arg8: memref<16x128xbf16, #tpu.memory_space<vmem>>) attributes {dimension_semantics = [#tpu.dimension_semantics<parallel>], iteration_bounds = array<i64: 1>, scalar_prefetch = 0 : i64, scratch_operands = 0 : i64, tpu.core_type = #tpu.core_type<tc>, window_params = [{transform_indices = @transform_0, window_bounds = array<i64: 16, 3072>}, {pipeline_mode = #tpu.pipeline_mode<synchronous>, transform_indices = @transform_1, window_bounds = array<i64: 3072, 128>}, {pipeline_mode = #tpu.pipeline_mode<synchronous>, transform_indices = @transform_2, window_bounds = array<i64: 1, 128>}, {pipeline_mode = #tpu.pipeline_mode<synchronous>, transform_indices = @transform_3, window_bounds = array<i64: 128, 128>}, {pipeline_mode = #tpu.pipeline_mode<synchronous>, transform_indices = @transform_4, window_bounds = array<i64: 1, 128>}, {pipeline_mode = #tpu.pipeline_mode<synchronous>, transform_indices = @transform_5, window_bounds = array<i64: 128, 128>}, {pipeline_mode = #tpu.pipeline_mode<synchronous>, transform_indices = @transform_6, window_bounds = array<i64: 1, 128>}, {transform_indices = @transform_7, window_bounds = array<i64: 16, 128>}]} {
    %c0 = arith.constant 0 : index
    %c0_0 = arith.constant 0 : index
    %0 = vector.load %arg1[%c0, %c0_0] : memref<16x3072xf32, #tpu.memory_space<vmem>>, vector<16x3072xf32>
    %1 = arith.truncf %0 : vector<16x3072xf32> to vector<16x3072xbf16>
    %c0_1 = arith.constant 0 : index
    %c0_2 = arith.constant 0 : index
    %2 = vector.load %arg2[%c0_1, %c0_2] : memref<3072x128xbf16, #tpu.memory_space<vmem>>, vector<3072x128xbf16>
    %cst = arith.constant dense<0.000000e+00> : vector<16x128xf32>
    %3 = tpu.matmul %1, %2, %cst {dimension_numbers = #tpu.dot_dimension_numbers<[1], [0], [0], [1], [0, 0, 1, 1], [], []>} : vector<16x3072xbf16>, vector<3072x128xbf16>, vector<16x128xf32> -> vector<16x128xf32>
    %c0_3 = arith.constant 0 : index
    %c0_4 = arith.constant 0 : index
    %4 = vector.load %arg3[%c0_3, %c0_4] : memref<1x128xf32, #tpu.memory_space<vmem>>, vector<1x128xf32>
    %5 = vector.broadcast %4 : vector<1x128xf32> to vector<16x128xf32>
    %6 = arith.addf %3, %5 : vector<16x128xf32>
    %cst_5 = arith.constant 0.000000e+00 : f32
    %7 = vector.broadcast %cst_5 : f32 to vector<16x128xf32>
    %8 = arith.maximumf %6, %7 : vector<16x128xf32>
    %9 = arith.truncf %8 : vector<16x128xf32> to vector<16x128xbf16>
    %c0_6 = arith.constant 0 : index
    %c0_7 = arith.constant 0 : index
    %10 = vector.load %arg4[%c0_6, %c0_7] : memref<128x128xbf16, #tpu.memory_space<vmem>>, vector<128x128xbf16>
    %cst_8 = arith.constant dense<0.000000e+00> : vector<16x128xf32>
    %11 = tpu.matmul %9, %10, %cst_8 {dimension_numbers = #tpu.dot_dimension_numbers<[1], [0], [0], [1], [0, 0, 1, 1], [], []>} : vector<16x128xbf16>, vector<128x128xbf16>, vector<16x128xf32> -> vector<16x128xf32>
    %c0_9 = arith.constant 0 : index
    %c0_10 = arith.constant 0 : index
    %12 = vector.load %arg5[%c0_9, %c0_10] : memref<1x128xf32, #tpu.memory_space<vmem>>, vector<1x128xf32>
    %13 = vector.broadcast %12 : vector<1x128xf32> to vector<16x128xf32>
    %14 = arith.addf %11, %13 : vector<16x128xf32>
    %cst_11 = arith.constant 0.000000e+00 : f32
    %15 = vector.broadcast %cst_11 : f32 to vector<16x128xf32>
    %16 = arith.maximumf %14, %15 : vector<16x128xf32>
    %17 = arith.truncf %16 : vector<16x128xf32> to vector<16x128xbf16>
    %c0_12 = arith.constant 0 : index
    %c0_13 = arith.constant 0 : index
    %18 = vector.load %arg6[%c0_12, %c0_13] : memref<128x128xbf16, #tpu.memory_space<vmem>>, vector<128x128xbf16>
    %cst_14 = arith.constant dense<0.000000e+00> : vector<16x128xf32>
    %19 = tpu.matmul %17, %18, %cst_14 {dimension_numbers = #tpu.dot_dimension_numbers<[1], [0], [0], [1], [0, 0, 1, 1], [], []>} : vector<16x128xbf16>, vector<128x128xbf16>, vector<16x128xf32> -> vector<16x128xf32>
    %c0_15 = arith.constant 0 : index
    %c0_16 = arith.constant 0 : index
    %20 = vector.load %arg7[%c0_15, %c0_16] : memref<1x128xf32, #tpu.memory_space<vmem>>, vector<1x128xf32>
    %21 = vector.broadcast %20 : vector<1x128xf32> to vector<16x128xf32>
    %22 = arith.addf %19, %21 : vector<16x128xf32>
    %23 = arith.truncf %22 : vector<16x128xf32> to vector<16x128xbf16>
    %c0_17 = arith.constant 0 : index
    %c0_18 = arith.constant 0 : index
    %24 = vector.load %arg8[%c0_17, %c0_18] : memref<16x128xbf16, #tpu.memory_space<vmem>>, vector<16x128xbf16>
    tpu.vector_store %arg8[%c0_17, %c0_18], %23 {strides = array<i32>} : memref<16x128xbf16, #tpu.memory_space<vmem>>, vector<16x128xbf16>,
    return
  }
  func.func @transform_0(%arg0: i32) -> (i32, i32) {
    %c0_i32 = arith.constant 0 : i32
    %c0_i32_0 = arith.constant 0 : i32
    return %arg0, %c0_i32 : i32, i32
  }
  func.func @transform_1(%arg0: i32) -> (i32, i32) {
    %c0_i32 = arith.constant 0 : i32
    %c0_i32_0 = arith.constant 0 : i32
    %c0_i32_1 = arith.constant 0 : i32
    return %c0_i32, %c0_i32_0 : i32, i32
  }
  func.func @transform_2(%arg0: i32) -> (i32, i32) {
    %c0_i32 = arith.constant 0 : i32
    %c0_i32_0 = arith.constant 0 : i32
    %c0_i32_1 = arith.constant 0 : i32
    return %c0_i32, %c0_i32_0 : i32, i32
  }
  func.func @transform_3(%arg0: i32) -> (i32, i32) {
    %c0_i32 = arith.constant 0 : i32
    %c0_i32_0 = arith.constant 0 : i32
    %c0_i32_1 = arith.constant 0 : i32
    return %c0_i32, %c0_i32_0 : i32, i32
  }
  func.func @transform_4(%arg0: i32) -> (i32, i32) {
    %c0_i32 = arith.constant 0 : i32
    %c0_i32_0 = arith.constant 0 : i32
    %c0_i32_1 = arith.constant 0 : i32
    return %c0_i32, %c0_i32_0 : i32, i32
  }
  func.func @transform_5(%arg0: i32) -> (i32, i32) {
    %c0_i32 = arith.constant 0 : i32
    %c0_i32_0 = arith.constant 0 : i32
    %c0_i32_1 = arith.constant 0 : i32
    return %c0_i32, %c0_i32_0 : i32, i32
  }
  func.func @transform_6(%arg0: i32) -> (i32, i32) {
    %c0_i32 = arith.constant 0 : i32
    %c0_i32_0 = arith.constant 0 : i32
    %c0_i32_1 = arith.constant 0 : i32
    return %c0_i32, %c0_i32_0 : i32, i32
  }
  func.func @transform_7(%arg0: i32) -> (i32, i32) {
    %c0_i32 = arith.constant 0 : i32
    %c0_i32_0 = arith.constant 0 : i32
    return %arg0, %c0_i32 : i32, i32
  }
}

</mosaic_0001>

<llo_original>
// kernel: tpu_custom_call.1
$region0: #{tpu_custom_call.1}
  #allocation0 [shape = 'u32[]', space=smem, size = 0x4, offset = 0x4, fixed_abs, tag = 'smem constant byte address 0x4 - core index']
  #allocation1 [shape = 'u32[144,128]{1,0:T(1,128)}', space=vmem, size = 0x12000, scoped, tag = 'internal scratch']
  %s0 = inlined_call_operand.hbm [shape: f32[2,3072], index: 0, kind: input, shape index: {}]
  %s1 = inlined_call_operand.hbm [shape: bf16[3072,128], index: 1, kind: input, shape index: {}]
  %s2 = inlined_call_operand.vmem [shape: f32[1,128], index: 2, kind: input, shape index: {}]
  %s3 = inlined_call_operand.hbm [shape: bf16[128,128], index: 3, kind: input, shape index: {}]
  %s4 = inlined_call_operand.vmem [shape: f32[1,128], index: 4, kind: input, shape index: {}]
  %s5 = inlined_call_operand.hbm [shape: bf16[128,128], index: 5, kind: input, shape index: {}]
  %s6 = inlined_call_operand.vmem [shape: f32[1,128], index: 6, kind: input, shape index: {}]
  %s7 = inlined_call_operand.hbm [shape: bf16[16,128], index: 7, kind: output, shape index: {}]
  %s8 = sld [smem:[#allocation0]]
  $region54: #{tpu_custom_call.1} parent=0
    _
  %s10 = ssub.s32 1, %s8
  %s11 = scalar_select 0, %s10, %s8
  $region1: #{tpu_custom_call.1} parent=0
    #allocation2 [shape = 'u8[196608]{0}', space=vmem, size = 0x30000, scoped, tag = 'input window, operand 0, single buffered']
    #allocation3 [shape = 's32[1]{0}', space=sflag, size = 0x4, scoped, tag = 'scoped memory for tpu_custom_call.1']
    #allocation4 [shape = 's32[1]{0}', space=sflag, size = 0x4, scoped, tag = 'scoped memory for tpu_custom_call.1']
    #allocation5 [shape = 'u8[786432]{0}', space=vmem, size = 0xc0000, scoped, tag = 'input window, operand 1, single buffered']
    #allocation6 [shape = 's32[1]{0}', space=sflag, size = 0x4, scoped, tag = 'scoped memory for tpu_custom_call.1']
    #allocation7 [shape = 'u8[32768]{0}', space=vmem, size = 0x8000, scoped, tag = 'input window, operand 3, single buffered']
    #allocation8 [shape = 'u8[32768]{0}', space=vmem, size = 0x8000, scoped, tag = 'input window, operand 5, single buffered']
    #allocation9 [shape = 's32[1]{0}', space=sflag, size = 0x4, scoped, tag = 'scoped memory for tpu_custom_call.1']
    #allocation10 [shape = 'u8[4096]{0}', space=vmem, size = 0x1000, scoped, tag = 'output window, operand 0, single buffered']
    %12 = vsyncpa [#allocation3], 0
    %13 = vsyncpa [#allocation6], 0
    %14 = vsyncpa [#allocation9], 0
    %15 = vsyncpa [#allocation4], 0
    // Predicated region
    $region2: #{tpu_custom_call.1} parent=1 // pred_check
      _
    $region3: #{tpu_custom_call.1} parent=1 // pred_check_branch
      %17 = sbr.rel (0) target = $region5
    $region4: #{tpu_custom_call.1} parent=1 // pred_region
      %s19 = ssub.s32 6144, 768
      %20 = vsyncadd [#allocation3], %s19
      %s21 = sshll.u32 [#allocation2], 4
      %s22 = int_to_ptr.vmem [resolvable:$true] %s21
      %27 = dma.hbm_to_vmem [thread:$0]  %s0, 768, %s22, [#allocation3], 768, 768, 48
    $region5: #{tpu_custom_call.1} parent=1 // pred_fallthru
      _
    // Predicated region
    $region6: #{tpu_custom_call.1} parent=1 // pred_check
      _
    $region7: #{tpu_custom_call.1} parent=1 // pred_check_branch
      %29 = sbr.rel (0) target = $region9
    $region8: #{tpu_custom_call.1} parent=1 // pred_region
      %s31 = ssub.s32 24576, 24576
      %32 = vsyncadd [#allocation6], %s31
      %s33 = sshll.u32 [#allocation5], 4
      %s34 = int_to_ptr.vmem [resolvable:$true] %s33
      %39 = dma.hbm_to_vmem [thread:$0]  %s1, 24576, %s34, [#allocation6], 64, 64, 4
    $region9: #{tpu_custom_call.1} parent=1 // pred_fallthru
      _
    // Predicated region
    $region10: #{tpu_custom_call.1} parent=1 // pred_check
      _
    $region11: #{tpu_custom_call.1} parent=1 // pred_check_branch
      %41 = sbr.rel (0) target = $region13
    $region12: #{tpu_custom_call.1} parent=1 // pred_region
      _
    $region13: #{tpu_custom_call.1} parent=1 // pred_fallthru
      _
    // Predicated region
    $region14: #{tpu_custom_call.1} parent=1 // pred_check
      _
    $region15: #{tpu_custom_call.1} parent=1 // pred_check_branch
      %43 = sbr.rel (0) target = $region17
    $region16: #{tpu_custom_call.1} parent=1 // pred_region
      %s45 = ssub.s32 1024, 1024
      %46 = vsyncadd [#allocation6], %s45
      %s47 = sshll.u32 [#allocation7], 4
      %s48 = int_to_ptr.vmem [resolvable:$true] %s47
      %53 = dma.hbm_to_vmem [thread:$0]  %s3, 1024, %s48, [#allocation6], 64, 64, 4
    $region17: #{tpu_custom_call.1} parent=1 // pred_fallthru
      _
    // Predicated region
    $region18: #{tpu_custom_call.1} parent=1 // pred_check
      _
    $region19: #{tpu_custom_call.1} parent=1 // pred_check_branch
      %55 = sbr.rel (0) target = $region21
    $region20: #{tpu_custom_call.1} parent=1 // pred_region
      _
    $region21: #{tpu_custom_call.1} parent=1 // pred_fallthru
      _
    // Predicated region
    $region22: #{tpu_custom_call.1} parent=1 // pred_check
      _
    $region23: #{tpu_custom_call.1} parent=1 // pred_check_branch
      %57 = sbr.rel (0) target = $region25
    $region24: #{tpu_custom_call.1} parent=1 // pred_region
      %s59 = ssub.s32 1024, 1024
      %60 = vsyncadd [#allocation9], %s59
      %s61 = sshll.u32 [#allocation8], 4
      %s62 = int_to_ptr.vmem [resolvable:$true] %s61
      %67 = dma.hbm_to_vmem [thread:$0]  %s5, 1024, %s62, [#allocation9], 64, 64, 4
    $region25: #{tpu_custom_call.1} parent=1 // pred_fallthru
      _
    // Predicated region
    $region26: #{tpu_custom_call.1} parent=1 // pred_check
      _
    $region27: #{tpu_custom_call.1} parent=1 // pred_check_branch
      %69 = sbr.rel (0) target = $region29
    $region28: #{tpu_custom_call.1} parent=1 // pred_region
      _
    $region29: #{tpu_custom_call.1} parent=1 // pred_fallthru
      _
    // Predicated region
    $region30: #{tpu_custom_call.1} parent=1 // pred_check
      _
    $region31: #{tpu_custom_call.1} parent=1 // pred_check_branch
      %71 = sbr.rel (0) target = $region33
    $region32: #{tpu_custom_call.1} parent=1 // pred_region
      %72 = dma.done [#allocation3], 6144
    $region33: #{tpu_custom_call.1} parent=1 // pred_fallthru
      _
    // Predicated region
    $region34: #{tpu_custom_call.1} parent=1 // pred_check
      _
    $region35: #{tpu_custom_call.1} parent=1 // pred_check_branch
      %74 = sbr.rel (0) target = $region37
    $region36: #{tpu_custom_call.1} parent=1 // pred_region
      %75 = dma.done [#allocation6], 24576
    $region37: #{tpu_custom_call.1} parent=1 // pred_fallthru
      _
    // Predicated region
    $region38: #{tpu_custom_call.1} parent=1 // pred_check
      _
    $region39: #{tpu_custom_call.1} parent=1 // pred_check_branch
      %77 = sbr.rel (0) target = $region41
    $region40: #{tpu_custom_call.1} parent=1 // pred_region
      %78 = dma.done [#allocation6], 1024
    $region41: #{tpu_custom_call.1} parent=1 // pred_fallthru
      _
    // Predicated region
    $region42: #{tpu_custom_call.1} parent=1 // pred_check
      _
    $region43: #{tpu_custom_call.1} parent=1 // pred_check_branch
      %80 = sbr.rel (0) target = $region45
    $region44: #{tpu_custom_call.1} parent=1 // pred_region
      %81 = dma.done [#allocation9], 1024
    $region45: #{tpu_custom_call.1} parent=1 // pred_fallthru
      _
    %v83 = vld [vmem:[#allocation2] sm:$0xff]
    %v84 = vld [vmem:[#allocation2 + $0x8] sm:$0xff]
    %v85 = vld [vmem:[#allocation2 + $0x10] sm:$0xff]
    %v86 = vld [vmem:[#allocation2 + $0x18] sm:$0xff]
    %v87 = vld [vmem:[#allocation2 + $0x20] sm:$0xff]
    %v88 = vld [vmem:[#allocation2 + $0x28] sm:$0xff]
    %v89 = vld [vmem:[#allocation2 + $0x30] sm:$0xff]
    %v90 = vld [vmem:[#allocation2 + $0x38] sm:$0xff]
    %v91 = vld [vmem:[#allocation2 + $0x40] sm:$0xff]
    %v92 = vld [vmem:[#allocation2 + $0x48] sm:$0xff]
    %v93 = vld [vmem:[#allocation2 + $0x50] sm:$0xff]
    %v94 = vld [vmem:[#allocation2 + $0x58] sm:$0xff]
    %v95 = vld [vmem:[#allocation2 + $0x60] sm:$0xff]
    %v96 = vld [vmem:[#allocation2 + $0x68] sm:$0xff]
    %v97 = vld [vmem:[#allocation2 + $0x70] sm:$0xff]
    %v98 = vld [vmem:[#allocation2 + $0x78] sm:$0xff]
    %v99 = vld [vmem:[#allocation2 + $0x80] sm:$0xff]
    %v100 = vld [vmem:[#allocation2 + $0x88] sm:$0xff]
    %v101 = vld [vmem:[#allocation2 + $0x90] sm:$0xff]
    %v102 = vld [vmem:[#allocation2 + $0x98] sm:$0xff]
    %v103 = vld [vmem:[#allocation2 + $0xa0] sm:$0xff]
    %v104 = vld [vmem:[#allocation2 + $0xa8] sm:$0xff]
    %v105 = vld [vmem:[#allocation2 + $0xb0] sm:$0xff]
    %v106 = vld [vmem:[#allocation2 + $0xb8] sm:$0xff]
    %v107 = vld [vmem:[#allocation2 + $0xc0] sm:$0xff]
    %v108 = vld [vmem:[#allocation2 + $0xc8] sm:$0xff]
    %v109 = vld [vmem:[#allocation2 + $0xd0] sm:$0xff]
    %v110 = vld [vmem:[#allocation2 + $0xd8] sm:$0xff]
    %v111 = vld [vmem:[#allocation2 + $0xe0] sm:$0xff]
    %v112 = vld [vmem:[#allocation2 + $0xe8] sm:$0xff]
    %v113 = vld [vmem:[#allocation2 + $0xf0] sm:$0xff]
    %v114 = vld [vmem:[#allocation2 + $0xf8] sm:$0xff]
    %v115 = vld [vmem:[#allocation2 + $0x100] sm:$0xff]
    %v116 = vld [vmem:[#allocation2 + $0x108] sm:$0xff]
    %v117 = vld [vmem:[#allocation2 + $0x110] sm:$0xff]
    %v118 = vld [vmem:[#allocation2 + $0x118] sm:$0xff]
    %v119 = vld [vmem:[#allocation2 + $0x120] sm:$0xff]
    %v120 = vld [vmem:[#allocation2 + $0x128] sm:$0xff]
    %v121 = vld [vmem:[#allocation2 + $0x130] sm:$0xff]
    %v122 = vld [vmem:[#allocation2 + $0x138] sm:$0xff]
    %v123 = vld [vmem:[#allocation2 + $0x140] sm:$0xff]
    %v124 = vld [vmem:[#allocation2 + $0x148] sm:$0xff]
    %v125 = vld [vmem:[#allocation2 + $0x150] sm:$0xff]
    %v126 = vld [vmem:[#allocation2 + $0x158] sm:$0xff]
    %v127 = vld [vmem:[#allocation2 + $0x160] sm:$0xff]
    %v128 = vld [vmem:[#allocation2 + $0x168] sm:$0xff]
    %v129 = vld [vmem:[#allocation2 + $0x170] sm:$0xff]
    %v130 = vld [vmem:[#allocation2 + $0x178] sm:$0xff]
    %v179 = vcombine.low %v83, %v89
    %v180 = vcombine.high %v83, %v89
    %v181 = vcombine.low %v95, %v101
    %v182 = vcombine.high %v95, %v101
    %v184 = vunpack.c.l.s4 1983009808
    %v185 = vunpack.c.0.s8 %v184
    %v186 = vlaneseq
    %v187 = vshrl.u32 %v186, 7
    %v188 = vsub.s32 %v185, %v187
    %v189 = vrot.slane %v179, %v188
    %v191 = vunpack.c.l.s4 1983009808
    %v192 = vunpack.c.0.s8 %v191
    %v193 = vlaneseq
    %v194 = vshrl.u32 %v193, 7
    %v195 = vsub.s32 %v192, %v194
    %v196 = vrot.slane %v180, %v195
    %v198 = vunpack.c.l.s4 1983009808
    %v199 = vunpack.c.0.s8 %v198
    %v200 = vlaneseq
    %v201 = vshrl.u32 %v200, 7
    %v202 = vsub.s32 %v199, %v201
    %v203 = vrot.slane %v181, %v202
    %v205 = vunpack.c.l.s4 1983009808
    %v206 = vunpack.c.0.s8 %v205
    %v207 = vlaneseq
    %v208 = vshrl.u32 %v207, 7
    %v209 = vsub.s32 %v206, %v208
    %v210 = vrot.slane %v182, %v209
    %v211 = vcombine.low %v189, %v203
    %v212 = vcombine.high %v189, %v203
    %v213 = vcombine.low %v196, %v210
    %v214 = vcombine.high %v196, %v210
    %v215 = vcombine.low %v84, %v90
    %v216 = vcombine.high %v84, %v90
    %v217 = vcombine.low %v96, %v102
    %v218 = vcombine.high %v96, %v102
    %v220 = vunpack.c.l.s4 1983009808
    %v221 = vunpack.c.0.s8 %v220
    %v222 = vlaneseq
    %v223 = vshrl.u32 %v222, 7
    %v224 = vsub.s32 %v221, %v223
    %v225 = vrot.slane %v215, %v224
    %v227 = vunpack.c.l.s4 1983009808
    %v228 = vunpack.c.0.s8 %v227
    %v229 = vlaneseq
    %v230 = vshrl.u32 %v229, 7
    %v231 = vsub.s32 %v228, %v230
    %v232 = vrot.slane %v216, %v231
    %v234 = vunpack.c.l.s4 1983009808
    %v235 = vunpack.c.0.s8 %v234
    %v236 = vlaneseq
    %v237 = vshrl.u32 %v236, 7
    %v238 = vsub.s32 %v235, %v237
    %v239 = vrot.slane %v217, %v238
    %v241 = vunpack.c.l.s4 1983009808
    %v242 = vunpack.c.0.s8 %v241
    %v243 = vlaneseq
    %v244 = vshrl.u32 %v243, 7
    %v245 = vsub.s32 %v242, %v244
    %v246 = vrot.slane %v218, %v245
    %v247 = vcombine.low %v225, %v239
    %v248 = vcombine.high %v225, %v239
    %v249 = vcombine.low %v232, %v246
    %v250 = vcombine.high %v232, %v246
    %v251 = vcombine.low %v85, %v91
    %v252 = vcombine.high %v85, %v91
    %v253 = vcombine.low %v97, %v103
    %v254 = vcombine.high %v97, %v103
    %v256 = vunpack.c.l.s4 1983009808
    %v257 = vunpack.c.0.s8 %v256
    %v258 = vlaneseq
    %v259 = vshrl.u32 %v258, 7
    %v260 = vsub.s32 %v257, %v259
    %v261 = vrot.slane %v251, %v260
    %v263 = vunpack.c.l.s4 1983009808
    %v264 = vunpack.c.0.s8 %v263
    %v265 = vlaneseq
    %v266 = vshrl.u32 %v265, 7
    %v267 = vsub.s32 %v264, %v266
    %v268 = vrot.slane %v252, %v267
    %v270 = vunpack.c.l.s4 1983009808
    %v271 = vunpack.c.0.s8 %v270
    %v272 = vlaneseq
    %v273 = vshrl.u32 %v272, 7
    %v274 = vsub.s32 %v271, %v273
    %v275 = vrot.slane %v253, %v274
    %v277 = vunpack.c.l.s4 1983009808
    %v278 = vunpack.c.0.s8 %v277
    %v279 = vlaneseq
    %v280 = vshrl.u32 %v279, 7
    %v281 = vsub.s32 %v278, %v280
    %v282 = vrot.slane %v254, %v281
    %v283 = vcombine.low %v261, %v275
    %v284 = vcombine.high %v261, %v275
    %v285 = vcombine.low %v268, %v282
    %v286 = vcombine.high %v268, %v282
    %v287 = vcombine.low %v86, %v92
    %v288 = vcombine.high %v86, %v92
    %v289 = vcombine.low %v98, %v104
    %v290 = vcombine.high %v98, %v104
    %v292 = vunpack.c.l.s4 1983009808
    %v293 = vunpack.c.0.s8 %v292
    %v294 = vlaneseq
    %v295 = vshrl.u32 %v294, 7
    %v296 = vsub.s32 %v293, %v295
    %v297 = vrot.slane %v287, %v296
    %v299 = vunpack.c.l.s4 1983009808
    %v300 = vunpack.c.0.s8 %v299
    %v301 = vlaneseq
    %v302 = vshrl.u32 %v301, 7
    %v303 = vsub.s32 %v300, %v302
    %v304 = vrot.slane %v288, %v303
    %v306 = vunpack.c.l.s4 1983009808
    %v307 = vunpack.c.0.s8 %v306
    %v308 = vlaneseq
    %v309 = vshrl.u32 %v308, 7
    %v310 = vsub.s32 %v307, %v309
    %v311 = vrot.slane %v289, %v310
    %v313 = vunpack.c.l.s4 1983009808
    %v314 = vunpack.c.0.s8 %v313
    %v315 = vlaneseq
    %v316 = vshrl.u32 %v315, 7
    %v317 = vsub.s32 %v314, %v316
    %v318 = vrot.slane %v290, %v317
    %v319 = vcombine.low %v297, %v311
    %v320 = vcombine.high %v297, %v311
    %v321 = vcombine.low %v304, %v318
    %v322 = vcombine.high %v304, %v318
    %v323 = vcombine.low %v87, %v93
    %v324 = vcombine.high %v87, %v93
    %v325 = vcombine.low %v99, %v105
    %v326 = vcombine.high %v99, %v105
    %v328 = vunpack.c.l.s4 1983009808
    %v329 = vunpack.c.0.s8 %v328
    %v330 = vlaneseq
    %v331 = vshrl.u32 %v330, 7
    %v332 = vsub.s32 %v329, %v331
    %v333 = vrot.slane %v323, %v332
    %v335 = vunpack.c.l.s4 1983009808
    %v336 = vunpack.c.0.s8 %v335
    %v337 = vlaneseq
    %v338 = vshrl.u32 %v337, 7
    %v339 = vsub.s32 %v336, %v338
    %v340 = vrot.slane %v324, %v339
    %v342 = vunpack.c.l.s4 1983009808
    %v343 = vunpack.c.0.s8 %v342
    %v344 = vlaneseq
    %v345 = vshrl.u32 %v344, 7
    %v346 = vsub.s32 %v343, %v345
    %v347 = vrot.slane %v325, %v346
    %v349 = vunpack.c.l.s4 1983009808
    %v350 = vunpack.c.0.s8 %v349
    %v351 = vlaneseq
    %v352 = vshrl.u32 %v351, 7
    %v353 = vsub.s32 %v350, %v352
    %v354 = vrot.slane %v326, %v353
    %v355 = vcombine.low %v333, %v347
    %v356 = vcombine.high %v333, %v347
    %v357 = vcombine.low %v340, %v354
    %v358 = vcombine.high %v340, %v354
    %v359 = vcombine.low %v88, %v94
    %v360 = vcombine.high %v88, %v94
    %v361 = vcombine.low %v100, %v106
    %v362 = vcombine.high %v100, %v106
    %v364 = vunpack.c.l.s4 1983009808
    %v365 = vunpack.c.0.s8 %v364
    %v366 = vlaneseq
    %v367 = vshrl.u32 %v366, 7
    %v368 = vsub.s32 %v365, %v367
    %v369 = vrot.slane %v359, %v368
    %v371 = vunpack.c.l.s4 1983009808
    %v372 = vunpack.c.0.s8 %v371
    %v373 = vlaneseq
    %v374 = vshrl.u32 %v373, 7
    %v375 = vsub.s32 %v372, %v374
    %v376 = vrot.slane %v360, %v375
    %v378 = vunpack.c.l.s4 1983009808
    %v379 = vunpack.c.0.s8 %v378
    %v380 = vlaneseq
    %v381 = vshrl.u32 %v380, 7
    %v382 = vsub.s32 %v379, %v381
    %v383 = vrot.slane %v361, %v382
    %v385 = vunpack.c.l.s4 1983009808
    %v386 = vunpack.c.0.s8 %v385
    %v387 = vlaneseq
    %v388 = vshrl.u32 %v387, 7
    %v389 = vsub.s32 %v386, %v388
    %v390 = vrot.slane %v362, %v389
    %v391 = vcombine.low %v369, %v383
    %v392 = vcombine.high %v369, %v383
    %v393 = vcombine.low %v376, %v390
    %v394 = vcombine.high %v376, %v390
    %v395 = vcombine.low %v107, %v113
    %v396 = vcombine.high %v107, %v113
    %v397 = vcombine.low %v119, %v125
    %v398 = vcombine.high %v119, %v125
    %v400 = vunpack.c.l.s4 1983009808
    %v401 = vunpack.c.0.s8 %v400
    %v402 = vlaneseq
    %v403 = vshrl.u32 %v402, 7
    %v404 = vsub.s32 %v401, %v403
    %v405 = vrot.slane %v395, %v404
    %v407 = vunpack.c.l.s4 1983009808
    %v408 = vunpack.c.0.s8 %v407
    %v409 = vlaneseq
    %v410 = vshrl.u32 %v409, 7
    %v411 = vsub.s32 %v408, %v410
    %v412 = vrot.slane %v396, %v411
    %v414 = vunpack.c.l.s4 1983009808
    %v415 = vunpack.c.0.s8 %v414
    %v416 = vlaneseq
    %v417 = vshrl.u32 %v416, 7
    %v418 = vsub.s32 %v415, %v417
    %v419 = vrot.slane %v397, %v418
    %v421 = vunpack.c.l.s4 1983009808
    %v422 = vunpack.c.0.s8 %v421
    %v423 = vlaneseq
    %v424 = vshrl.u32 %v423, 7
    %v425 = vsub.s32 %v422, %v424
    %v426 = vrot.slane %v398, %v425
    %v427 = vcombine.low %v405, %v419
    %v428 = vcombine.high %v405, %v419
    %v429 = vcombine.low %v412, %v426
    %v430 = vcombine.high %v412, %v426
    %v431 = vcombine.low %v108, %v114
    %v432 = vcombine.high %v108, %v114
    %v433 = vcombine.low %v120, %v126
    %v434 = vcombine.high %v120, %v126
    %v436 = vunpack.c.l.s4 1983009808
    %v437 = vunpack.c.0.s8 %v436
    %v438 = vlaneseq
    %v439 = vshrl.u32 %v438, 7
    %v440 = vsub.s32 %v437, %v439
    %v441 = vrot.slane %v431, %v440
    %v443 = vunpack.c.l.s4 1983009808
    %v444 = vunpack.c.0.s8 %v443
    %v445 = vlaneseq
    %v446 = vshrl.u32 %v445, 7
    %v447 = vsub.s32 %v444, %v446
    %v448 = vrot.slane %v432, %v447
    %v450 = vunpack.c.l.s4 1983009808
    %v451 = vunpack.c.0.s8 %v450
    %v452 = vlaneseq
    %v453 = vshrl.u32 %v452, 7
    %v454 = vsub.s32 %v451, %v453
    %v455 = vrot.slane %v433, %v454
    %v457 = vunpack.c.l.s4 1983009808
    %v458 = vunpack.c.0.s8 %v457
    %v459 = vlaneseq
    %v460 = vshrl.u32 %v459, 7
    %v461 = vsub.s32 %v458, %v460
    %v462 = vrot.slane %v434, %v461
    %v463 = vcombine.low %v441, %v455
    %v464 = vcombine.high %v441, %v455
    %v465 = vcombine.low %v448, %v462
    %v466 = vcombine.high %v448, %v462
    %v467 = vcombine.low %v109, %v115
    %v468 = vcombine.high %v109, %v115
    %v469 = vcombine.low %v121, %v127
    %v470 = vcombine.high %v121, %v127
    %v472 = vunpack.c.l.s4 1983009808
    %v473 = vunpack.c.0.s8 %v472
    %v474 = vlaneseq
    %v475 = vshrl.u32 %v474, 7
    %v476 = vsub.s32 %v473, %v475
    %v477 = vrot.slane %v467, %v476
    %v479 = vunpack.c.l.s4 1983009808
    %v480 = vunpack.c.0.s8 %v479
    %v481 = vlaneseq
    %v482 = vshrl.u32 %v481, 7
    %v483 = vsub.s32 %v480, %v482
    %v484 = vrot.slane %v468, %v483
    %v486 = vunpack.c.l.s4 1983009808
    %v487 = vunpack.c.0.s8 %v486
    %v488 = vlaneseq
    %v489 = vshrl.u32 %v488, 7
    %v490 = vsub.s32 %v487, %v489
    %v491 = vrot.slane %v469, %v490
    %v493 = vunpack.c.l.s4 1983009808
    %v494 = vunpack.c.0.s8 %v493
    %v495 = vlaneseq
    %v496 = vshrl.u32 %v495, 7
    %v497 = vsub.s32 %v494, %v496
    %v498 = vrot.slane %v470, %v497
    %v499 = vcombine.low %v477, %v491
    %v500 = vcombine.high %v477, %v491
    %v501 = vcombine.low %v484, %v498
    %v502 = vcombine.high %v484, %v498
    %v503 = vcombine.low %v110, %v116
    %v504 = vcombine.high %v110, %v116
    %v505 = vcombine.low %v122, %v128
    %v506 = vcombine.high %v122, %v128
    %v508 = vunpack.c.l.s4 1983009808
    %v509 = vunpack.c.0.s8 %v508
    %v510 = vlaneseq
    %v511 = vshrl.u32 %v510, 7
    %v512 = vsub.s32 %v509, %v511
    %v513 = vrot.slane %v503, %v512
    %v515 = vunpack.c.l.s4 1983009808
    %v516 = vunpack.c.0.s8 %v515
    %v517 = vlaneseq
    %v518 = vshrl.u32 %v517, 7
    %v519 = vsub.s32 %v516, %v518
    %v520 = vrot.slane %v504, %v519
    %v522 = vunpack.c.l.s4 1983009808
    %v523 = vunpack.c.0.s8 %v522
    %v524 = vlaneseq
    %v525 = vshrl.u32 %v524, 7
    %v526 = vsub.s32 %v523, %v525
    %v527 = vrot.slane %v505, %v526
    %v529 = vunpack.c.l.s4 1983009808
    %v530 = vunpack.c.0.s8 %v529
    %v531 = vlaneseq
    %v532 = vshrl.u32 %v531, 7
    %v533 = vsub.s32 %v530, %v532
    %v534 = vrot.slane %v506, %v533
    %v535 = vcombine.low %v513, %v527
    %v536 = vcombine.high %v513, %v527
    %v537 = vcombine.low %v520, %v534
    %v538 = vcombine.high %v520, %v534
    %v539 = vcombine.low %v111, %v117
    %v540 = vcombine.high %v111, %v117
    %v541 = vcombine.low %v123, %v129
    %v542 = vcombine.high %v123, %v129
    %v544 = vunpack.c.l.s4 1983009808
    %v545 = vunpack.c.0.s8 %v544
    %v546 = vlaneseq
    %v547 = vshrl.u32 %v546, 7
    %v548 = vsub.s32 %v545, %v547
    %v549 = vrot.slane %v539, %v548
    %v551 = vunpack.c.l.s4 1983009808
    %v552 = vunpack.c.0.s8 %v551
    %v553 = vlaneseq
    %v554 = vshrl.u32 %v553, 7
    %v555 = vsub.s32 %v552, %v554
    %v556 = vrot.slane %v540, %v555
    %v558 = vunpack.c.l.s4 1983009808
    %v559 = vunpack.c.0.s8 %v558
    %v560 = vlaneseq
    %v561 = vshrl.u32 %v560, 7
    %v562 = vsub.s32 %v559, %v561
    %v563 = vrot.slane %v541, %v562
    %v565 = vunpack.c.l.s4 1983009808
    %v566 = vunpack.c.0.s8 %v565
    %v567 = vlaneseq
    %v568 = vshrl.u32 %v567, 7
    %v569 = vsub.s32 %v566, %v568
    %v570 = vrot.slane %v542, %v569
    %v571 = vcombine.low %v549, %v563
    %v572 = vcombine.high %v549, %v563
    %v573 = vcombine.low %v556, %v570
    %v574 = vcombine.high %v556, %v570
    %v575 = vcombine.low %v112, %v118
    %v576 = vcombine.high %v112, %v118
    %v577 = vcombine.low %v124, %v130
    %v578 = vcombine.high %v124, %v130
    %v580 = vunpack.c.l.s4 1983009808
    %v581 = vunpack.c.0.s8 %v580
    %v582 = vlaneseq
    %v583 = vshrl.u32 %v582, 7
    %v584 = vsub.s32 %v581, %v583
    %v585 = vrot.slane %v575, %v584
    %v587 = vunpack.c.l.s4 1983009808
    %v588 = vunpack.c.0.s8 %v587
    %v589 = vlaneseq
    %v590 = vshrl.u32 %v589, 7
    %v591 = vsub.s32 %v588, %v590
    %v592 = vrot.slane %v576, %v591
    %v594 = vunpack.c.l.s4 1983009808
    %v595 = vunpack.c.0.s8 %v594
    %v596 = vlaneseq
    %v597 = vshrl.u32 %v596, 7
    %v598 = vsub.s32 %v595, %v597
    %v599 = vrot.slane %v577, %v598
    %v601 = vunpack.c.l.s4 1983009808
    %v602 = vunpack.c.0.s8 %v601
    %v603 = vlaneseq
    %v604 = vshrl.u32 %v603, 7
    %v605 = vsub.s32 %v602, %v604
    %v606 = vrot.slane %v578, %v605
    %v607 = vcombine.low %v585, %v599
    %v608 = vcombine.high %v585, %v599
    %v609 = vcombine.low %v592, %v606
    %v610 = vcombine.high %v592, %v606
    %v659 = vpack.c.bf16 %v427, %v211
    %v660 = vpack.c.bf16 %v428, %v212
    %v661 = vpack.c.bf16 %v429, %v213
    %v662 = vpack.c.bf16 %v430, %v214
    %v663 = vpack.c.bf16 %v463, %v247
    %v664 = vpack.c.bf16 %v464, %v248
    %v665 = vpack.c.bf16 %v465, %v249
    %v666 = vpack.c.bf16 %v466, %v250
    %v667 = vpack.c.bf16 %v499, %v283
    %v668 = vpack.c.bf16 %v500, %v284
    %v669 = vpack.c.bf16 %v501, %v285
    %v670 = vpack.c.bf16 %v502, %v286
    %v671 = vpack.c.bf16 %v535, %v319
    %v672 = vpack.c.bf16 %v536, %v320
    %v673 = vpack.c.bf16 %v537, %v321
    %v674 = vpack.c.bf16 %v538, %v322
    %v675 = vpack.c.bf16 %v571, %v355
    %v676 = vpack.c.bf16 %v572, %v356
    %v677 = vpack.c.bf16 %v573, %v357
    %v678 = vpack.c.bf16 %v574, %v358
    %v679 = vpack.c.bf16 %v607, %v391
    %v680 = vpack.c.bf16 %v608, %v392
    %v681 = vpack.c.bf16 %v609, %v393
    %v682 = vpack.c.bf16 %v610, %v394
    %v683 = vld [vmem:[#allocation5] sm:$0xf]
    %v684 = vld [vmem:[#allocation5 + $0x4] sm:$0xf]
    %v685 = vld [vmem:[#allocation5 + $0x8] sm:$0xf]
    %v686 = vld [vmem:[#allocation5 + $0xc] sm:$0xf]
    %v687 = vld [vmem:[#allocation5 + $0x10] sm:$0xf]
    %v688 = vld [vmem:[#allocation5 + $0x14] sm:$0xf]
    %v689 = vld [vmem:[#allocation5 + $0x18] sm:$0xf]
    %v690 = vld [vmem:[#allocation5 + $0x1c] sm:$0xf]
    %v691 = vld [vmem:[#allocation5 + $0x20] sm:$0xf]
    %v692 = vld [vmem:[#allocation5 + $0x24] sm:$0xf]
    %v693 = vld [vmem:[#allocation5 + $0x28] sm:$0xf]
    %v694 = vld [vmem:[#allocation5 + $0x2c] sm:$0xf]
    %v695 = vld [vmem:[#allocation5 + $0x30] sm:$0xf]
    %v696 = vld [vmem:[#allocation5 + $0x34] sm:$0xf]
    %v697 = vld [vmem:[#allocation5 + $0x38] sm:$0xf]
    %v698 = vld [vmem:[#allocation5 + $0x3c] sm:$0xf]
    %v699 = vld [vmem:[#allocation5 + $0x40] sm:$0xf]
    %v700 = vld [vmem:[#allocation5 + $0x44] sm:$0xf]
    %v701 = vld [vmem:[#allocation5 + $0x48] sm:$0xf]
    %v702 = vld [vmem:[#allocation5 + $0x4c] sm:$0xf]
    %v703 = vld [vmem:[#allocation5 + $0x50] sm:$0xf]
    %v704 = vld [vmem:[#allocation5 + $0x54] sm:$0xf]
    %v705 = vld [vmem:[#allocation5 + $0x58] sm:$0xf]
    %v706 = vld [vmem:[#allocation5 + $0x5c] sm:$0xf]
    %v707 = vld [vmem:[#allocation5 + $0x60] sm:$0xf]
    %v708 = vld [vmem:[#allocation5 + $0x64] sm:$0xf]
    %v709 = vld [vmem:[#allocation5 + $0x68] sm:$0xf]
    %v710 = vld [vmem:[#allocation5 + $0x6c] sm:$0xf]
    %v711 = vld [vmem:[#allocation5 + $0x70] sm:$0xf]
    %v712 = vld [vmem:[#allocation5 + $0x74] sm:$0xf]
    %v713 = vld [vmem:[#allocation5 + $0x78] sm:$0xf]
    %v714 = vld [vmem:[#allocation5 + $0x7c] sm:$0xf]
    %v715 = vld [vmem:[#allocation5 + $0x80] sm:$0xf]
    %v716 = vld [vmem:[#allocation5 + $0x84] sm:$0xf]
    %v717 = vld [vmem:[#allocation5 + $0x88] sm:$0xf]
    %v718 = vld [vmem:[#allocation5 + $0x8c] sm:$0xf]
    %v719 = vld [vmem:[#allocation5 + $0x90] sm:$0xf]
    %v720 = vld [vmem:[#allocation5 + $0x94] sm:$0xf]
    %v721 = vld [vmem:[#allocation5 + $0x98] sm:$0xf]
    %v722 = vld [vmem:[#allocation5 + $0x9c] sm:$0xf]
    %v723 = vld [vmem:[#allocation5 + $0xa0] sm:$0xf]
    %v724 = vld [vmem:[#allocation5 + $0xa4] sm:$0xf]
    %v725 = vld [vmem:[#allocation5 + $0xa8] sm:$0xf]
    %v726 = vld [vmem:[#allocation5 + $0xac] sm:$0xf]
    %v727 = vld [vmem:[#allocation5 + $0xb0] sm:$0xf]
    %v728 = vld [vmem:[#allocation5 + $0xb4] sm:$0xf]
    %v729 = vld [vmem:[#allocation5 + $0xb8] sm:$0xf]
    %v730 = vld [vmem:[#allocation5 + $0xbc] sm:$0xf]
    %v731 = vld [vmem:[#allocation5 + $0xc0] sm:$0xf]
    %v732 = vld [vmem:[#allocation5 + $0xc4] sm:$0xf]
    %v733 = vld [vmem:[#allocation5 + $0xc8] sm:$0xf]
    %v734 = vld [vmem:[#allocation5 + $0xcc] sm:$0xf]
    %v735 = vld [vmem:[#allocation5 + $0xd0] sm:$0xf]
    %v736 = vld [vmem:[#allocation5 + $0xd4] sm:$0xf]
    %v737 = vld [vmem:[#allocation5 + $0xd8] sm:$0xf]
    %v738 = vld [vmem:[#allocation5 + $0xdc] sm:$0xf]
    %v739 = vld [vmem:[#allocation5 + $0xe0] sm:$0xf]
    %v740 = vld [vmem:[#allocation5 + $0xe4] sm:$0xf]
    %v741 = vld [vmem:[#allocation5 + $0xe8] sm:$0xf]
    %v742 = vld [vmem:[#allocation5 + $0xec] sm:$0xf]
    %v743 = vld [vmem:[#allocation5 + $0xf0] sm:$0xf]
    %v744 = vld [vmem:[#allocation5 + $0xf4] sm:$0xf]
    %v745 = vld [vmem:[#allocation5 + $0xf8] sm:$0xf]
    %v746 = vld [vmem:[#allocation5 + $0xfc] sm:$0xf]
    %v747 = vld [vmem:[#allocation5 + $0x100] sm:$0xf]
    %v748 = vld [vmem:[#allocation5 + $0x104] sm:$0xf]
    %v749 = vld [vmem:[#allocation5 + $0x108] sm:$0xf]
    %v750 = vld [vmem:[#allocation5 + $0x10c] sm:$0xf]
    %v751 = vld [vmem:[#allocation5 + $0x110] sm:$0xf]
    %v752 = vld [vmem:[#allocation5 + $0x114] sm:$0xf]
    %v753 = vld [vmem:[#allocation5 + $0x118] sm:$0xf]
    %v754 = vld [vmem:[#allocation5 + $0x11c] sm:$0xf]
    %v755 = vld [vmem:[#allocation5 + $0x120] sm:$0xf]
    %v756 = vld [vmem:[#allocation5 + $0x124] sm:$0xf]
    %v757 = vld [vmem:[#allocation5 + $0x128] sm:$0xf]
    %v758 = vld [vmem:[#allocation5 + $0x12c] sm:$0xf]
    %v759 = vld [vmem:[#allocation5 + $0x130] sm:$0xf]
    %v760 = vld [vmem:[#allocation5 + $0x134] sm:$0xf]
    %v761 = vld [vmem:[#allocation5 + $0x138] sm:$0xf]
    %v762 = vld [vmem:[#allocation5 + $0x13c] sm:$0xf]
    %v763 = vld [vmem:[#allocation5 + $0x140] sm:$0xf]
    %v764 = vld [vmem:[#allocation5 + $0x144] sm:$0xf]
    %v765 = vld [vmem:[#allocation5 + $0x148] sm:$0xf]
    %v766 = vld [vmem:[#allocation5 + $0x14c] sm:$0xf]
    %v767 = vld [vmem:[#allocation5 + $0x150] sm:$0xf]
    %v768 = vld [vmem:[#allocation5 + $0x154] sm:$0xf]
    %v769 = vld [vmem:[#allocation5 + $0x158] sm:$0xf]
    %v770 = vld [vmem:[#allocation5 + $0x15c] sm:$0xf]
    %v771 = vld [vmem:[#allocation5 + $0x160] sm:$0xf]
    %v772 = vld [vmem:[#allocation5 + $0x164] sm:$0xf]
    %v773 = vld [vmem:[#allocation5 + $0x168] sm:$0xf]
    %v774 = vld [vmem:[#allocation5 + $0x16c] sm:$0xf]
    %v775 = vld [vmem:[#allocation5 + $0x170] sm:$0xf]
    %v776 = vld [vmem:[#allocation5 + $0x174] sm:$0xf]
    %v777 = vld [vmem:[#allocation5 + $0x178] sm:$0xf]
    %v778 = vld [vmem:[#allocation5 + $0x17c] sm:$0xf]
    %v779 = vld [vmem:[#allocation5 + $0x180] sm:$0xf]
    %v780 = vld [vmem:[#allocation5 + $0x184] sm:$0xf]
    %v781 = vld [vmem:[#allocation5 + $0x188] sm:$0xf]
    %v782 = vld [vmem:[#allocation5 + $0x18c] sm:$0xf]
    %v783 = vld [vmem:[#allocation5 + $0x190] sm:$0xf]
    %v784 = vld [vmem:[#allocation5 + $0x194] sm:$0xf]
    %v785 = vld [vmem:[#allocation5 + $0x198] sm:$0xf]
    %v786 = vld [vmem:[#allocation5 + $0x19c] sm:$0xf]
    %v787 = vld [vmem:[#allocation5 + $0x1a0] sm:$0xf]
    %v788 = vld [vmem:[#allocation5 + $0x1a4] sm:$0xf]
    %v789 = vld [vmem:[#allocation5 + $0x1a8] sm:$0xf]
    %v790 = vld [vmem:[#allocation5 + $0x1ac] sm:$0xf]
    %v791 = vld [vmem:[#allocation5 + $0x1b0] sm:$0xf]
    %v792 = vld [vmem:[#allocation5 + $0x1b4] sm:$0xf]
    %v793 = vld [vmem:[#allocation5 + $0x1b8] sm:$0xf]
    %v794 = vld [vmem:[#allocation5 + $0x1bc] sm:$0xf]
    %v795 = vld [vmem:[#allocation5 + $0x1c0] sm:$0xf]
    %v796 = vld [vmem:[#allocation5 + $0x1c4] sm:$0xf]
    %v797 = vld [vmem:[#allocation5 + $0x1c8] sm:$0xf]
    %v798 = vld [vmem:[#allocation5 + $0x1cc] sm:$0xf]
    %v799 = vld [vmem:[#allocation5 + $0x1d0] sm:$0xf]
    %v800 = vld [vmem:[#allocation5 + $0x1d4] sm:$0xf]
    %v801 = vld [vmem:[#allocation5 + $0x1d8] sm:$0xf]
    %v802 = vld [vmem:[#allocation5 + $0x1dc] sm:$0xf]
    %v803 = vld [vmem:[#allocation5 + $0x1e0] sm:$0xf]
    %v804 = vld [vmem:[#allocation5 + $0x1e4] sm:$0xf]
    %v805 = vld [vmem:[#allocation5 + $0x1e8] sm:$0xf]
    %v806 = vld [vmem:[#allocation5 + $0x1ec] sm:$0xf]
    %v807 = vld [vmem:[#allocation5 + $0x1f0] sm:$0xf]
    %v808 = vld [vmem:[#allocation5 + $0x1f4] sm:$0xf]
    %v809 = vld [vmem:[#allocation5 + $0x1f8] sm:$0xf]
    %v810 = vld [vmem:[#allocation5 + $0x1fc] sm:$0xf]
    %v811 = vld [vmem:[#allocation5 + $0x200] sm:$0xf]
    %v812 = vld [vmem:[#allocation5 + $0x204] sm:$0xf]
    %v813 = vld [vmem:[#allocation5 + $0x208] sm:$0xf]
    %v814 = vld [vmem:[#allocation5 + $0x20c] sm:$0xf]
    %v815 = vld [vmem:[#allocation5 + $0x210] sm:$0xf]
    %v816 = vld [vmem:[#allocation5 + $0x214] sm:$0xf]
    %v817 = vld [vmem:[#allocation5 + $0x218] sm:$0xf]
    %v818 = vld [vmem:[#allocation5 + $0x21c] sm:$0xf]
    %v819 = vld [vmem:[#allocation5 + $0x220] sm:$0xf]
    %v820 = vld [vmem:[#allocation5 + $0x224] sm:$0xf]
    %v821 = vld [vmem:[#allocation5 + $0x228] sm:$0xf]
    %v822 = vld [vmem:[#allocation5 + $0x22c] sm:$0xf]
    %v823 = vld [vmem:[#allocation5 + $0x230] sm:$0xf]
    %v824 = vld [vmem:[#allocation5 + $0x234] sm:$0xf]
    %v825 = vld [vmem:[#allocation5 + $0x238] sm:$0xf]
    %v826 = vld [vmem:[#allocation5 + $0x23c] sm:$0xf]
    %v827 = vld [vmem:[#allocation5 + $0x240] sm:$0xf]
    %v828 = vld [vmem:[#allocation5 + $0x244] sm:$0xf]
    %v829 = vld [vmem:[#allocation5 + $0x248] sm:$0xf]
    %v830 = vld [vmem:[#allocation5 + $0x24c] sm:$0xf]
    %v831 = vld [vmem:[#allocation5 + $0x250] sm:$0xf]
    %v832 = vld [vmem:[#allocation5 + $0x254] sm:$0xf]
    %v833 = vld [vmem:[#allocation5 + $0x258] sm:$0xf]
    %v834 = vld [vmem:[#allocation5 + $0x25c] sm:$0xf]
    %v835 = vld [vmem:[#allocation5 + $0x260] sm:$0xf]
    %v836 = vld [vmem:[#allocation5 + $0x264] sm:$0xf]
    %v837 = vld [vmem:[#allocation5 + $0x268] sm:$0xf]
    %v838 = vld [vmem:[#allocation5 + $0x26c] sm:$0xf]
    %v839 = vld [vmem:[#allocation5 + $0x270] sm:$0xf]
    %v840 = vld [vmem:[#allocation5 + $0x274] sm:$0xf]
    %v841 = vld [vmem:[#allocation5 + $0x278] sm:$0xf]
    %v842 = vld [vmem:[#allocation5 + $0x27c] sm:$0xf]
    %v843 = vld [vmem:[#allocation5 + $0x280] sm:$0xf]
    %v844 = vld [vmem:[#allocation5 + $0x284] sm:$0xf]
    %v845 = vld [vmem:[#allocation5 + $0x288] sm:$0xf]
    %v846 = vld [vmem:[#allocation5 + $0x28c] sm:$0xf]
    %v847 = vld [vmem:[#allocation5 + $0x290] sm:$0xf]
    %v848 = vld [vmem:[#allocation5 + $0x294] sm:$0xf]
    %v849 = vld [vmem:[#allocation5 + $0x298] sm:$0xf]
    %v850 = vld [vmem:[#allocation5 + $0x29c] sm:$0xf]
    %v851 = vld [vmem:[#allocation5 + $0x2a0] sm:$0xf]
    %v852 = vld [vmem:[#allocation5 + $0x2a4] sm:$0xf]
    %v853 = vld [vmem:[#allocation5 + $0x2a8] sm:$0xf]
    %v854 = vld [vmem:[#allocation5 + $0x2ac] sm:$0xf]
    %v855 = vld [vmem:[#allocation5 + $0x2b0] sm:$0xf]
    %v856 = vld [vmem:[#allocation5 + $0x2b4] sm:$0xf]
    %v857 = vld [vmem:[#allocation5 + $0x2b8] sm:$0xf]
    %v858 = vld [vmem:[#allocation5 + $0x2bc] sm:$0xf]
    %v859 = vld [vmem:[#allocation5 + $0x2c0] sm:$0xf]
    %v860 = vld [vmem:[#allocation5 + $0x2c4] sm:$0xf]
    %v861 = vld [vmem:[#allocation5 + $0x2c8] sm:$0xf]
    %v862 = vld [vmem:[#allocation5 + $0x2cc] sm:$0xf]
    %v863 = vld [vmem:[#allocation5 + $0x2d0] sm:$0xf]
    %v864 = vld [vmem:[#allocation5 + $0x2d4] sm:$0xf]
    %v865 = vld [vmem:[#allocation5 + $0x2d8] sm:$0xf]
    %v866 = vld [vmem:[#allocation5 + $0x2dc] sm:$0xf]
    %v867 = vld [vmem:[#allocation5 + $0x2e0] sm:$0xf]
    %v868 = vld [vmem:[#allocation5 + $0x2e4] sm:$0xf]
    %v869 = vld [vmem:[#allocation5 + $0x2e8] sm:$0xf]
    %v870 = vld [vmem:[#allocation5 + $0x2ec] sm:$0xf]
    %v871 = vld [vmem:[#allocation5 + $0x2f0] sm:$0xf]
    %v872 = vld [vmem:[#allocation5 + $0x2f4] sm:$0xf]
    %v873 = vld [vmem:[#allocation5 + $0x2f8] sm:$0xf]
    %v874 = vld [vmem:[#allocation5 + $0x2fc] sm:$0xf]
    %v875 = vld [vmem:[#allocation5 + $0x300] sm:$0xf]
    %v876 = vld [vmem:[#allocation5 + $0x304] sm:$0xf]
    %v877 = vld [vmem:[#allocation5 + $0x308] sm:$0xf]
    %v878 = vld [vmem:[#allocation5 + $0x30c] sm:$0xf]
    %v879 = vld [vmem:[#allocation5 + $0x310] sm:$0xf]
    %v880 = vld [vmem:[#allocation5 + $0x314] sm:$0xf]
    %v881 = vld [vmem:[#allocation5 + $0x318] sm:$0xf]
    %v882 = vld [vmem:[#allocation5 + $0x31c] sm:$0xf]
    %v883 = vld [vmem:[#allocation5 + $0x320] sm:$0xf]
    %v884 = vld [vmem:[#allocation5 + $0x324] sm:$0xf]
    %v885 = vld [vmem:[#allocation5 + $0x328] sm:$0xf]
    %v886 = vld [vmem:[#allocation5 + $0x32c] sm:$0xf]
    %v887 = vld [vmem:[#allocation5 + $0x330] sm:$0xf]
    %v888 = vld [vmem:[#allocation5 + $0x334] sm:$0xf]
    %v889 = vld [vmem:[#allocation5 + $0x338] sm:$0xf]
    %v890 = vld [vmem:[#allocation5 + $0x33c] sm:$0xf]
    %v891 = vld [vmem:[#allocation5 + $0x340] sm:$0xf]
    %v892 = vld [vmem:[#allocation5 + $0x344] sm:$0xf]
    %v893 = vld [vmem:[#allocation5 + $0x348] sm:$0xf]
    %v894 = vld [vmem:[#allocation5 + $0x34c] sm:$0xf]
    %v895 = vld [vmem:[#allocation5 + $0x350] sm:$0xf]
    %v896 = vld [vmem:[#allocation5 + $0x354] sm:$0xf]
    %v897 = vld [vmem:[#allocation5 + $0x358] sm:$0xf]
    %v898 = vld [vmem:[#allocation5 + $0x35c] sm:$0xf]
    %v899 = vld [vmem:[#allocation5 + $0x360] sm:$0xf]
    %v900 = vld [vmem:[#allocation5 + $0x364] sm:$0xf]
    %v901 = vld [vmem:[#allocation5 + $0x368] sm:$0xf]
    %v902 = vld [vmem:[#allocation5 + $0x36c] sm:$0xf]
    %v903 = vld [vmem:[#allocation5 + $0x370] sm:$0xf]
    %v904 = vld [vmem:[#allocation5 + $0x374] sm:$0xf]
    %v905 = vld [vmem:[#allocation5 + $0x378] sm:$0xf]
    %v906 = vld [vmem:[#allocation5 + $0x37c] sm:$0xf]
    %v907 = vld [vmem:[#allocation5 + $0x380] sm:$0xf]
    %v908 = vld [vmem:[#allocation5 + $0x384] sm:$0xf]
    %v909 = vld [vmem:[#allocation5 + $0x388] sm:$0xf]
    %v910 = vld [vmem:[#allocation5 + $0x38c] sm:$0xf]
    %v911 = vld [vmem:[#allocation5 + $0x390] sm:$0xf]
    %v912 = vld [vmem:[#allocation5 + $0x394] sm:$0xf]
    %v913 = vld [vmem:[#allocation5 + $0x398] sm:$0xf]
    %v914 = vld [vmem:[#allocation5 + $0x39c] sm:$0xf]
    %v915 = vld [vmem:[#allocation5 + $0x3a0] sm:$0xf]
    %v916 = vld [vmem:[#allocation5 + $0x3a4] sm:$0xf]
    %v917 = vld [vmem:[#allocation5 + $0x3a8] sm:$0xf]
    %v918 = vld [vmem:[#allocation5 + $0x3ac] sm:$0xf]
    %v919 = vld [vmem:[#allocation5 + $0x3b0] sm:$0xf]
    %v920 = vld [vmem:[#allocation5 + $0x3b4] sm:$0xf]
    %v921 = vld [vmem:[#allocation5 + $0x3b8] sm:$0xf]
    %v922 = vld [vmem:[#allocation5 + $0x3bc] sm:$0xf]
    %v923 = vld [vmem:[#allocation5 + $0x3c0] sm:$0xf]
    %v924 = vld [vmem:[#allocation5 + $0x3c4] sm:$0xf]
    %v925 = vld [vmem:[#allocation5 + $0x3c8] sm:$0xf]
    %v926 = vld [vmem:[#allocation5 + $0x3cc] sm:$0xf]
    %v927 = vld [vmem:[#allocation5 + $0x3d0] sm:$0xf]
    %v928 = vld [vmem:[#allocation5 + $0x3d4] sm:$0xf]
    %v929 = vld [vmem:[#allocation5 + $0x3d8] sm:$0xf]
    %v930 = vld [vmem:[#allocation5 + $0x3dc] sm:$0xf]
    %v931 = vld [vmem:[#allocation5 + $0x3e0] sm:$0xf]
    %v932 = vld [vmem:[#allocation5 + $0x3e4] sm:$0xf]
    %v933 = vld [vmem:[#allocation5 + $0x3e8] sm:$0xf]
    %v934 = vld [vmem:[#allocation5 + $0x3ec] sm:$0xf]
    %v935 = vld [vmem:[#allocation5 + $0x3f0] sm:$0xf]
    %v936 = vld [vmem:[#allocation5 + $0x3f4] sm:$0xf]
    %v937 = vld [vmem:[#allocation5 + $0x3f8] sm:$0xf]
    %v938 = vld [vmem:[#allocation5 + $0x3fc] sm:$0xf]
    %v939 = vld [vmem:[#allocation5 + $0x400] sm:$0xf]
    %v940 = vld [vmem:[#allocation5 + $0x404] sm:$0xf]
    %v941 = vld [vmem:[#allocation5 + $0x408] sm:$0xf]
    %v942 = vld [vmem:[#allocation5 + $0x40c] sm:$0xf]
    %v943 = vld [vmem:[#allocation5 + $0x410] sm:$0xf]
    %v944 = vld [vmem:[#allocation5 + $0x414] sm:$0xf]
    %v945 = vld [vmem:[#allocation5 + $0x418] sm:$0xf]
    %v946 = vld [vmem:[#allocation5 + $0x41c] sm:$0xf]
    %v947 = vld [vmem:[#allocation5 + $0x420] sm:$0xf]
    %v948 = vld [vmem:[#allocation5 + $0x424] sm:$0xf]
    %v949 = vld [vmem:[#allocation5 + $0x428] sm:$0xf]
    %v950 = vld [vmem:[#allocation5 + $0x42c] sm:$0xf]
    %v951 = vld [vmem:[#allocation5 + $0x430] sm:$0xf]
    %v952 = vld [vmem:[#allocation5 + $0x434] sm:$0xf]
    %v953 = vld [vmem:[#allocation5 + $0x438] sm:$0xf]
    %v954 = vld [vmem:[#allocation5 + $0x43c] sm:$0xf]
    %v955 = vld [vmem:[#allocation5 + $0x440] sm:$0xf]
    %v956 = vld [vmem:[#allocation5 + $0x444] sm:$0xf]
    %v957 = vld [vmem:[#allocation5 + $0x448] sm:$0xf]
    %v958 = vld [vmem:[#allocation5 + $0x44c] sm:$0xf]
    %v959 = vld [vmem:[#allocation5 + $0x450] sm:$0xf]
    %v960 = vld [vmem:[#allocation5 + $0x454] sm:$0xf]
    %v961 = vld [vmem:[#allocation5 + $0x458] sm:$0xf]
    %v962 = vld [vmem:[#allocation5 + $0x45c] sm:$0xf]
    %v963 = vld [vmem:[#allocation5 + $0x460] sm:$0xf]
    %v964 = vld [vmem:[#allocation5 + $0x464] sm:$0xf]
    %v965 = vld [vmem:[#allocation5 + $0x468] sm:$0xf]
    %v966 = vld [vmem:[#allocation5 + $0x46c] sm:$0xf]
    %v967 = vld [vmem:[#allocation5 + $0x470] sm:$0xf]
    %v968 = vld [vmem:[#allocation5 + $0x474] sm:$0xf]
    %v969 = vld [vmem:[#allocation5 + $0x478] sm:$0xf]
    %v970 = vld [vmem:[#allocation5 + $0x47c] sm:$0xf]
    %v971 = vld [vmem:[#allocation5 + $0x480] sm:$0xf]
    %v972 = vld [vmem:[#allocation5 + $0x484] sm:$0xf]
    %v973 = vld [vmem:[#allocation5 + $0x488] sm:$0xf]
    %v974 = vld [vmem:[#allocation5 + $0x48c] sm:$0xf]
    %v975 = vld [vmem:[#allocation5 + $0x490] sm:$0xf]
    %v976 = vld [vmem:[#allocation5 + $0x494] sm:$0xf]
    %v977 = vld [vmem:[#allocation5 + $0x498] sm:$0xf]
    %v978 = vld [vmem:[#allocation5 + $0x49c] sm:$0xf]
    %v979 = vld [vmem:[#allocation5 + $0x4a0] sm:$0xf]
    %v980 = vld [vmem:[#allocation5 + $0x4a4] sm:$0xf]
    %v981 = vld [vmem:[#allocation5 + $0x4a8] sm:$0xf]
    %v982 = vld [vmem:[#allocation5 + $0x4ac] sm:$0xf]
    %v983 = vld [vmem:[#allocation5 + $0x4b0] sm:$0xf]
    %v984 = vld [vmem:[#allocation5 + $0x4b4] sm:$0xf]
    %v985 = vld [vmem:[#allocation5 + $0x4b8] sm:$0xf]
    %v986 = vld [vmem:[#allocation5 + $0x4bc] sm:$0xf]
    %v987 = vld [vmem:[#allocation5 + $0x4c0] sm:$0xf]
    %v988 = vld [vmem:[#allocation5 + $0x4c4] sm:$0xf]
    %v989 = vld [vmem:[#allocation5 + $0x4c8] sm:$0xf]
    %v990 = vld [vmem:[#allocation5 + $0x4cc] sm:$0xf]
    %v991 = vld [vmem:[#allocation5 + $0x4d0] sm:$0xf]
    %v992 = vld [vmem:[#allocation5 + $0x4d4] sm:$0xf]
    %v993 = vld [vmem:[#allocation5 + $0x4d8] sm:$0xf]
    %v994 = vld [vmem:[#allocation5 + $0x4dc] sm:$0xf]
    %v995 = vld [vmem:[#allocation5 + $0x4e0] sm:$0xf]
    %v996 = vld [vmem:[#allocation5 + $0x4e4] sm:$0xf]
    %v997 = vld [vmem:[#allocation5 + $0x4e8] sm:$0xf]
    %v998 = vld [vmem:[#allocation5 + $0x4ec] sm:$0xf]
    %v999 = vld [vmem:[#allocation5 + $0x4f0] sm:$0xf]
    %v1000 = vld [vmem:[#allocation5 + $0x4f4] sm:$0xf]
    %v1001 = vld [vmem:[#allocation5 + $0x4f8] sm:$0xf]
    %v1002 = vld [vmem:[#allocation5 + $0x4fc] sm:$0xf]
    %v1003 = vld [vmem:[#allocation5 + $0x500] sm:$0xf]
    %v1004 = vld [vmem:[#allocation5 + $0x504] sm:$0xf]
    %v1005 = vld [vmem:[#allocation5 + $0x508] sm:$0xf]
    %v1006 = vld [vmem:[#allocation5 + $0x50c] sm:$0xf]
    %v1007 = vld [vmem:[#allocation5 + $0x510] sm:$0xf]
    %v1008 = vld [vmem:[#allocation5 + $0x514] sm:$0xf]
    %v1009 = vld [vmem:[#allocation5 + $0x518] sm:$0xf]
    %v1010 = vld [vmem:[#allocation5 + $0x51c] sm:$0xf]
    %v1011 = vld [vmem:[#allocation5 + $0x520] sm:$0xf]
    %v1012 = vld [vmem:[#allocation5 + $0x524] sm:$0xf]
    %v1013 = vld [vmem:[#allocation5 + $0x528] sm:$0xf]
    %v1014 = vld [vmem:[#allocation5 + $0x52c] sm:$0xf]
    %v1015 = vld [vmem:[#allocation5 + $0x530] sm:$0xf]
    %v1016 = vld [vmem:[#allocation5 + $0x534] sm:$0xf]
    %v1017 = vld [vmem:[#allocation5 + $0x538] sm:$0xf]
    %v1018 = vld [vmem:[#allocation5 + $0x53c] sm:$0xf]
    %v1019 = vld [vmem:[#allocation5 + $0x540] sm:$0xf]
    %v1020 = vld [vmem:[#allocation5 + $0x544] sm:$0xf]
    %v1021 = vld [vmem:[#allocation5 + $0x548] sm:$0xf]
    %v1022 = vld [vmem:[#allocation5 + $0x54c] sm:$0xf]
    %v1023 = vld [vmem:[#allocation5 + $0x550] sm:$0xf]
    %v1024 = vld [vmem:[#allocation5 + $0x554] sm:$0xf]
    %v1025 = vld [vmem:[#allocation5 + $0x558] sm:$0xf]
    %v1026 = vld [vmem:[#allocation5 + $0x55c] sm:$0xf]
    %v1027 = vld [vmem:[#allocation5 + $0x560] sm:$0xf]
    %v1028 = vld [vmem:[#allocation5 + $0x564] sm:$0xf]
    %v1029 = vld [vmem:[#allocation5 + $0x568] sm:$0xf]
    %v1030 = vld [vmem:[#allocation5 + $0x56c] sm:$0xf]
    %v1031 = vld [vmem:[#allocation5 + $0x570] sm:$0xf]
    %v1032 = vld [vmem:[#allocation5 + $0x574] sm:$0xf]
    %v1033 = vld [vmem:[#allocation5 + $0x578] sm:$0xf]
    %v1034 = vld [vmem:[#allocation5 + $0x57c] sm:$0xf]
    %v1035 = vld [vmem:[#allocation5 + $0x580] sm:$0xf]
    %v1036 = vld [vmem:[#allocation5 + $0x584] sm:$0xf]
    %v1037 = vld [vmem:[#allocation5 + $0x588] sm:$0xf]
    %v1038 = vld [vmem:[#allocation5 + $0x58c] sm:$0xf]
    %v1039 = vld [vmem:[#allocation5 + $0x590] sm:$0xf]
    %v1040 = vld [vmem:[#allocation5 + $0x594] sm:$0xf]
    %v1041 = vld [vmem:[#allocation5 + $0x598] sm:$0xf]
    %v1042 = vld [vmem:[#allocation5 + $0x59c] sm:$0xf]
    %v1043 = vld [vmem:[#allocation5 + $0x5a0] sm:$0xf]
    %v1044 = vld [vmem:[#allocation5 + $0x5a4] sm:$0xf]
    %v1045 = vld [vmem:[#allocation5 + $0x5a8] sm:$0xf]
    %v1046 = vld [vmem:[#allocation5 + $0x5ac] sm:$0xf]
    %v1047 = vld [vmem:[#allocation5 + $0x5b0] sm:$0xf]
    %v1048 = vld [vmem:[#allocation5 + $0x5b4] sm:$0xf]
    %v1049 = vld [vmem:[#allocation5 + $0x5b8] sm:$0xf]
    %v1050 = vld [vmem:[#allocation5 + $0x5bc] sm:$0xf]
    %v1051 = vld [vmem:[#allocation5 + $0x5c0] sm:$0xf]
    %v1052 = vld [vmem:[#allocation5 + $0x5c4] sm:$0xf]
    %v1053 = vld [vmem:[#allocation5 + $0x5c8] sm:$0xf]
    %v1054 = vld [vmem:[#allocation5 + $0x5cc] sm:$0xf]
    %v1055 = vld [vmem:[#allocation5 + $0x5d0] sm:$0xf]
    %v1056 = vld [vmem:[#allocation5 + $0x5d4] sm:$0xf]
    %v1057 = vld [vmem:[#allocation5 + $0x5d8] sm:$0xf]
    %v1058 = vld [vmem:[#allocation5 + $0x5dc] sm:$0xf]
    %v1059 = vld [vmem:[#allocation5 + $0x5e0] sm:$0xf]
    %v1060 = vld [vmem:[#allocation5 + $0x5e4] sm:$0xf]
    %v1061 = vld [vmem:[#allocation5 + $0x5e8] sm:$0xf]
    %v1062 = vld [vmem:[#allocation5 + $0x5ec] sm:$0xf]
    %v1063 = vld [vmem:[#allocation5 + $0x5f0] sm:$0xf]
    %v1064 = vld [vmem:[#allocation5 + $0x5f4] sm:$0xf]
    %v1065 = vld [vmem:[#allocation5 + $0x5f8] sm:$0xf]
    %v1066 = vld [vmem:[#allocation5 + $0x5fc] sm:$0xf]
    %v1067 = vld [vmem:[%s2] sm:$0x1]
    %v1069 = vlaneseq
    %v1070 = vshrl.u32 %v1069, 7
    %v1071 = vsub.s32 0, %v1070
    %v1072 = vrot.slane %v1067, %v1071
    %v1458 = vunpack.c.l.b16 %v683
    %v1459 = vunpack.c.l.b16 %v684
    %v1460 = vunpack.c.l.b16 %v685
    %v1461 = vunpack.c.l.b16 %v686
    %v1462 = vunpack.c.l.b16 %v687
    %v1463 = vunpack.c.l.b16 %v688
    %v1464 = vunpack.c.l.b16 %v689
    %v1465 = vunpack.c.l.b16 %v690
    %v1466 = vunpack.c.l.b16 %v691
    %v1467 = vunpack.c.l.b16 %v692
    %v1468 = vunpack.c.l.b16 %v693
    %v1469 = vunpack.c.l.b16 %v694
    %v1470 = vunpack.c.l.b16 %v695
    %v1471 = vunpack.c.l.b16 %v696
    %v1472 = vunpack.c.l.b16 %v697
    %v1473 = vunpack.c.l.b16 %v698
    %v1474 = vunpack.c.l.b16 %v699
    %v1475 = vunpack.c.l.b16 %v700
    %v1476 = vunpack.c.l.b16 %v701
    %v1477 = vunpack.c.l.b16 %v702
    %v1478 = vunpack.c.l.b16 %v703
    %v1479 = vunpack.c.l.b16 %v704
    %v1480 = vunpack.c.l.b16 %v705
    %v1481 = vunpack.c.l.b16 %v706
    %v1482 = vunpack.c.l.b16 %v707
    %v1483 = vunpack.c.l.b16 %v708
    %v1484 = vunpack.c.l.b16 %v709
    %v1485 = vunpack.c.l.b16 %v710
    %v1486 = vunpack.c.l.b16 %v711
    %v1487 = vunpack.c.l.b16 %v712
    %v1488 = vunpack.c.l.b16 %v713
    %v1489 = vunpack.c.l.b16 %v714
    %v1490 = vunpack.c.l.b16 %v715
    %v1491 = vunpack.c.l.b16 %v716
    %v1492 = vunpack.c.l.b16 %v717
    %v1493 = vunpack.c.l.b16 %v718
    %v1494 = vunpack.c.l.b16 %v719
    %v1495 = vunpack.c.l.b16 %v720
    %v1496 = vunpack.c.l.b16 %v721
    %v1497 = vunpack.c.l.b16 %v722
    %v1498 = vunpack.c.l.b16 %v723
    %v1499 = vunpack.c.l.b16 %v724
    %v1500 = vunpack.c.l.b16 %v725
    %v1501 = vunpack.c.l.b16 %v726
    %v1502 = vunpack.c.l.b16 %v727
    %v1503 = vunpack.c.l.b16 %v728
    %v1504 = vunpack.c.l.b16 %v729
    %v1505 = vunpack.c.l.b16 %v730
    %v1506 = vunpack.c.l.b16 %v731
    %v1507 = vunpack.c.l.b16 %v732
    %v1508 = vunpack.c.l.b16 %v733
    %v1509 = vunpack.c.l.b16 %v734
    %v1510 = vunpack.c.l.b16 %v735
    %v1511 = vunpack.c.l.b16 %v736
    %v1512 = vunpack.c.l.b16 %v737
    %v1513 = vunpack.c.l.b16 %v738
    %v1514 = vunpack.c.l.b16 %v739
    %v1515 = vunpack.c.l.b16 %v740
    %v1516 = vunpack.c.l.b16 %v741
    %v1517 = vunpack.c.l.b16 %v742
    %v1518 = vunpack.c.l.b16 %v743
    %v1519 = vunpack.c.l.b16 %v744
    %v1520 = vunpack.c.l.b16 %v745
    %v1521 = vunpack.c.l.b16 %v746
    %v1522 = vunpack.c.l.b16 %v747
    %v1523 = vunpack.c.l.b16 %v748
    %v1524 = vunpack.c.l.b16 %v749
    %v1525 = vunpack.c.l.b16 %v750
    %v1526 = vunpack.c.l.b16 %v751
    %v1527 = vunpack.c.l.b16 %v752
    %v1528 = vunpack.c.l.b16 %v753
    %v1529 = vunpack.c.l.b16 %v754
    %v1530 = vunpack.c.l.b16 %v755
    %v1531 = vunpack.c.l.b16 %v756
    %v1532 = vunpack.c.l.b16 %v757
    %v1533 = vunpack.c.l.b16 %v758
    %v1534 = vunpack.c.l.b16 %v759
    %v1535 = vunpack.c.l.b16 %v760
    %v1536 = vunpack.c.l.b16 %v761
    %v1537 = vunpack.c.l.b16 %v762
    %v1538 = vunpack.c.l.b16 %v763
    %v1539 = vunpack.c.l.b16 %v764
    %v1540 = vunpack.c.l.b16 %v765
    %v1541 = vunpack.c.l.b16 %v766
    %v1542 = vunpack.c.l.b16 %v767
    %v1543 = vunpack.c.l.b16 %v768
    %v1544 = vunpack.c.l.b16 %v769
    %v1545 = vunpack.c.l.b16 %v770
    %v1546 = vunpack.c.l.b16 %v771
    %v1547 = vunpack.c.l.b16 %v772
    %v1548 = vunpack.c.l.b16 %v773
    %v1549 = vunpack.c.l.b16 %v774
    %v1550 = vunpack.c.l.b16 %v775
    %v1551 = vunpack.c.l.b16 %v776
    %v1552 = vunpack.c.l.b16 %v777
    %v1553 = vunpack.c.l.b16 %v778
    %v1554 = vunpack.c.l.b16 %v779
    %v1555 = vunpack.c.l.b16 %v780
    %v1556 = vunpack.c.l.b16 %v781
    %v1557 = vunpack.c.l.b16 %v782
    %v1558 = vunpack.c.l.b16 %v783
    %v1559 = vunpack.c.l.b16 %v784
    %v1560 = vunpack.c.l.b16 %v785
    %v1561 = vunpack.c.l.b16 %v786
    %v1562 = vunpack.c.l.b16 %v787
    %v1563 = vunpack.c.l.b16 %v788
    %v1564 = vunpack.c.l.b16 %v789
    %v1565 = vunpack.c.l.b16 %v790
    %v1566 = vunpack.c.l.b16 %v791
    %v1567 = vunpack.c.l.b16 %v792
    %v1568 = vunpack.c.l.b16 %v793
    %v1569 = vunpack.c.l.b16 %v794
    %v1570 = vunpack.c.l.b16 %v795
    %v1571 = vunpack.c.l.b16 %v796
    %v1572 = vunpack.c.l.b16 %v797
    %v1573 = vunpack.c.l.b16 %v798
    %v1574 = vunpack.c.l.b16 %v799
    %v1575 = vunpack.c.l.b16 %v800
    %v1576 = vunpack.c.l.b16 %v801
    %v1577 = vunpack.c.l.b16 %v802
    %v1578 = vunpack.c.l.b16 %v803
    %v1579 = vunpack.c.l.b16 %v804
    %v1580 = vunpack.c.l.b16 %v805
    %v1581 = vunpack.c.l.b16 %v806
    %v1582 = vunpack.c.l.b16 %v807
    %v1583 = vunpack.c.l.b16 %v808
    %v1584 = vunpack.c.l.b16 %v809
    %v1585 = vunpack.c.l.b16 %v810
    %v1586 = vunpack.c.l.b16 %v811
    %v1587 = vunpack.c.l.b16 %v812
    %v1588 = vunpack.c.l.b16 %v813
    %v1589 = vunpack.c.l.b16 %v814
    %v1590 = vunpack.c.l.b16 %v815
    %v1591 = vunpack.c.l.b16 %v816
    %v1592 = vunpack.c.l.b16 %v817
    %v1593 = vunpack.c.l.b16 %v818
    %v1594 = vunpack.c.l.b16 %v819
    %v1595 = vunpack.c.l.b16 %v820
    %v1596 = vunpack.c.l.b16 %v821
    %v1597 = vunpack.c.l.b16 %v822
    %v1598 = vunpack.c.l.b16 %v823
    %v1599 = vunpack.c.l.b16 %v824
    %v1600 = vunpack.c.l.b16 %v825
    %v1601 = vunpack.c.l.b16 %v826
    %v1602 = vunpack.c.l.b16 %v827
    %v1603 = vunpack.c.l.b16 %v828
    %v1604 = vunpack.c.l.b16 %v829
    %v1605 = vunpack.c.l.b16 %v830
    %v1606 = vunpack.c.l.b16 %v831
    %v1607 = vunpack.c.l.b16 %v832
    %v1608 = vunpack.c.l.b16 %v833
    %v1609 = vunpack.c.l.b16 %v834
    %v1610 = vunpack.c.l.b16 %v835
    %v1611 = vunpack.c.l.b16 %v836
    %v1612 = vunpack.c.l.b16 %v837
    %v1613 = vunpack.c.l.b16 %v838
    %v1614 = vunpack.c.l.b16 %v839
    %v1615 = vunpack.c.l.b16 %v840
    %v1616 = vunpack.c.l.b16 %v841
    %v1617 = vunpack.c.l.b16 %v842
    %v1618 = vunpack.c.l.b16 %v843
    %v1619 = vunpack.c.l.b16 %v844
    %v1620 = vunpack.c.l.b16 %v845
    %v1621 = vunpack.c.l.b16 %v846
    %v1622 = vunpack.c.l.b16 %v847
    %v1623 = vunpack.c.l.b16 %v848
    %v1624 = vunpack.c.l.b16 %v849
    %v1625 = vunpack.c.l.b16 %v850
    %v1626 = vunpack.c.l.b16 %v851
    %v1627 = vunpack.c.l.b16 %v852
    %v1628 = vunpack.c.l.b16 %v853
    %v1629 = vunpack.c.l.b16 %v854
    %v1630 = vunpack.c.l.b16 %v855
    %v1631 = vunpack.c.l.b16 %v856
    %v1632 = vunpack.c.l.b16 %v857
    %v1633 = vunpack.c.l.b16 %v858
    %v1634 = vunpack.c.l.b16 %v859
    %v1635 = vunpack.c.l.b16 %v860
    %v1636 = vunpack.c.l.b16 %v861
    %v1637 = vunpack.c.l.b16 %v862
    %v1638 = vunpack.c.l.b16 %v863
    %v1639 = vunpack.c.l.b16 %v864
    %v1640 = vunpack.c.l.b16 %v865
    %v1641 = vunpack.c.l.b16 %v866
    %v1642 = vunpack.c.l.b16 %v867
    %v1643 = vunpack.c.l.b16 %v868
    %v1644 = vunpack.c.l.b16 %v869
    %v1645 = vunpack.c.l.b16 %v870
    %v1646 = vunpack.c.l.b16 %v871
    %v1647 = vunpack.c.l.b16 %v872
    %v1648 = vunpack.c.l.b16 %v873
    %v1649 = vunpack.c.l.b16 %v874
    %v1650 = vunpack.c.l.b16 %v875
    %v1651 = vunpack.c.l.b16 %v876
    %v1652 = vunpack.c.l.b16 %v877
    %v1653 = vunpack.c.l.b16 %v878
    %v1654 = vunpack.c.l.b16 %v879
    %v1655 = vunpack.c.l.b16 %v880
    %v1656 = vunpack.c.l.b16 %v881
    %v1657 = vunpack.c.l.b16 %v882
    %v1658 = vunpack.c.l.b16 %v883
    %v1659 = vunpack.c.l.b16 %v884
    %v1660 = vunpack.c.l.b16 %v885
    %v1661 = vunpack.c.l.b16 %v886
    %v1662 = vunpack.c.l.b16 %v887
    %v1663 = vunpack.c.l.b16 %v888
    %v1664 = vunpack.c.l.b16 %v889
    %v1665 = vunpack.c.l.b16 %v890
    %v1666 = vunpack.c.l.b16 %v891
    %v1667 = vunpack.c.l.b16 %v892
    %v1668 = vunpack.c.l.b16 %v893
    %v1669 = vunpack.c.l.b16 %v894
    %v1670 = vunpack.c.l.b16 %v895
    %v1671 = vunpack.c.l.b16 %v896
    %v1672 = vunpack.c.l.b16 %v897
    %v1673 = vunpack.c.l.b16 %v898
    %v1674 = vunpack.c.l.b16 %v899
    %v1675 = vunpack.c.l.b16 %v900
    %v1676 = vunpack.c.l.b16 %v901
    %v1677 = vunpack.c.l.b16 %v902
    %v1678 = vunpack.c.l.b16 %v903
    %v1679 = vunpack.c.l.b16 %v904
    %v1680 = vunpack.c.l.b16 %v905
    %v1681 = vunpack.c.l.b16 %v906
    %v1682 = vunpack.c.l.b16 %v907
    %v1683 = vunpack.c.l.b16 %v908
    %v1684 = vunpack.c.l.b16 %v909
    %v1685 = vunpack.c.l.b16 %v910
    %v1686 = vunpack.c.l.b16 %v911
    %v1687 = vunpack.c.l.b16 %v912
    %v1688 = vunpack.c.l.b16 %v913
    %v1689 = vunpack.c.l.b16 %v914
    %v1690 = vunpack.c.l.b16 %v915
    %v1691 = vunpack.c.l.b16 %v916
    %v1692 = vunpack.c.l.b16 %v917
    %v1693 = vunpack.c.l.b16 %v918
    %v1694 = vunpack.c.l.b16 %v919
    %v1695 = vunpack.c.l.b16 %v920
    %v1696 = vunpack.c.l.b16 %v921
    %v1697 = vunpack.c.l.b16 %v922
    %v1698 = vunpack.c.l.b16 %v923
    %v1699 = vunpack.c.l.b16 %v924
    %v1700 = vunpack.c.l.b16 %v925
    %v1701 = vunpack.c.l.b16 %v926
    %v1702 = vunpack.c.l.b16 %v927
    %v1703 = vunpack.c.l.b16 %v928
    %v1704 = vunpack.c.l.b16 %v929
    %v1705 = vunpack.c.l.b16 %v930
    %v1706 = vunpack.c.l.b16 %v931
    %v1707 = vunpack.c.l.b16 %v932
    %v1708 = vunpack.c.l.b16 %v933
    %v1709 = vunpack.c.l.b16 %v934
    %v1710 = vunpack.c.l.b16 %v935
    %v1711 = vunpack.c.l.b16 %v936
    %v1712 = vunpack.c.l.b16 %v937
    %v1713 = vunpack.c.l.b16 %v938
    %v1714 = vunpack.c.l.b16 %v939
    %v1715 = vunpack.c.l.b16 %v940
    %v1716 = vunpack.c.l.b16 %v941
    %v1717 = vunpack.c.l.b16 %v942
    %v1718 = vunpack.c.l.b16 %v943
    %v1719 = vunpack.c.l.b16 %v944
    %v1720 = vunpack.c.l.b16 %v945
    %v1721 = vunpack.c.l.b16 %v946
    %v1722 = vunpack.c.l.b16 %v947
    %v1723 = vunpack.c.l.b16 %v948
    %v1724 = vunpack.c.l.b16 %v949
    %v1725 = vunpack.c.l.b16 %v950
    %v1726 = vunpack.c.l.b16 %v951
    %v1727 = vunpack.c.l.b16 %v952
    %v1728 = vunpack.c.l.b16 %v953
    %v1729 = vunpack.c.l.b16 %v954
    %v1730 = vunpack.c.l.b16 %v955
    %v1731 = vunpack.c.l.b16 %v956
    %v1732 = vunpack.c.l.b16 %v957
    %v1733 = vunpack.c.l.b16 %v958
    %v1734 = vunpack.c.l.b16 %v959
    %v1735 = vunpack.c.l.b16 %v960
    %v1736 = vunpack.c.l.b16 %v961
    %v1737 = vunpack.c.l.b16 %v962
    %v1738 = vunpack.c.l.b16 %v963
    %v1739 = vunpack.c.l.b16 %v964
    %v1740 = vunpack.c.l.b16 %v965
    %v1741 = vunpack.c.l.b16 %v966
    %v1742 = vunpack.c.l.b16 %v967
    %v1743 = vunpack.c.l.b16 %v968
    %v1744 = vunpack.c.l.b16 %v969
    %v1745 = vunpack.c.l.b16 %v970
    %v1746 = vunpack.c.l.b16 %v971
    %v1747 = vunpack.c.l.b16 %v972
    %v1748 = vunpack.c.l.b16 %v973
    %v1749 = vunpack.c.l.b16 %v974
    %v1750 = vunpack.c.l.b16 %v975
    %v1751 = vunpack.c.l.b16 %v976
    %v1752 = vunpack.c.l.b16 %v977
    %v1753 = vunpack.c.l.b16 %v978
    %v1754 = vunpack.c.l.b16 %v979
    %v1755 = vunpack.c.l.b16 %v980
    %v1756 = vunpack.c.l.b16 %v981
    %v1757 = vunpack.c.l.b16 %v982
    %v1758 = vunpack.c.l.b16 %v983
    %v1759 = vunpack.c.l.b16 %v984
    %v1760 = vunpack.c.l.b16 %v985
    %v1761 = vunpack.c.l.b16 %v986
    %v1762 = vunpack.c.l.b16 %v987
    %v1763 = vunpack.c.l.b16 %v988
    %v1764 = vunpack.c.l.b16 %v989
    %v1765 = vunpack.c.l.b16 %v990
    %v1766 = vunpack.c.l.b16 %v991
    %v1767 = vunpack.c.l.b16 %v992
    %v1768 = vunpack.c.l.b16 %v993
    %v1769 = vunpack.c.l.b16 %v994
    %v1770 = vunpack.c.l.b16 %v995
    %v1771 = vunpack.c.l.b16 %v996
    %v1772 = vunpack.c.l.b16 %v997
    %v1773 = vunpack.c.l.b16 %v998
    %v1774 = vunpack.c.l.b16 %v999
    %v1775 = vunpack.c.l.b16 %v1000
    %v1776 = vunpack.c.l.b16 %v1001
    %v1777 = vunpack.c.l.b16 %v1002
    %v1778 = vunpack.c.l.b16 %v1003
    %v1779 = vunpack.c.l.b16 %v1004
    %v1780 = vunpack.c.l.b16 %v1005
    %v1781 = vunpack.c.l.b16 %v1006
    %v1782 = vunpack.c.l.b16 %v1007
    %v1783 = vunpack.c.l.b16 %v1008
    %v1784 = vunpack.c.l.b16 %v1009
    %v1785 = vunpack.c.l.b16 %v1010
    %v1786 = vunpack.c.l.b16 %v1011
    %v1787 = vunpack.c.l.b16 %v1012
    %v1788 = vunpack.c.l.b16 %v1013
    %v1789 = vunpack.c.l.b16 %v1014
    %v1790 = vunpack.c.l.b16 %v1015
    %v1791 = vunpack.c.l.b16 %v1016
    %v1792 = vunpack.c.l.b16 %v1017
    %v1793 = vunpack.c.l.b16 %v1018
    %v1794 = vunpack.c.l.b16 %v1019
    %v1795 = vunpack.c.l.b16 %v1020
    %v1796 = vunpack.c.l.b16 %v1021
    %v1797 = vunpack.c.l.b16 %v1022
    %v1798 = vunpack.c.l.b16 %v1023
    %v1799 = vunpack.c.l.b16 %v1024
    %v1800 = vunpack.c.l.b16 %v1025
    %v1801 = vunpack.c.l.b16 %v1026
    %v1802 = vunpack.c.l.b16 %v1027
    %v1803 = vunpack.c.l.b16 %v1028
    %v1804 = vunpack.c.l.b16 %v1029
    %v1805 = vunpack.c.l.b16 %v1030
    %v1806 = vunpack.c.l.b16 %v1031
    %v1807 = vunpack.c.l.b16 %v1032
    %v1808 = vunpack.c.l.b16 %v1033
    %v1809 = vunpack.c.l.b16 %v1034
    %v1810 = vunpack.c.l.b16 %v1035
    %v1811 = vunpack.c.l.b16 %v1036
    %v1812 = vunpack.c.l.b16 %v1037
    %v1813 = vunpack.c.l.b16 %v1038
    %v1814 = vunpack.c.l.b16 %v1039
    %v1815 = vunpack.c.l.b16 %v1040
    %v1816 = vunpack.c.l.b16 %v1041
    %v1817 = vunpack.c.l.b16 %v1042
    %v1818 = vunpack.c.l.b16 %v1043
    %v1819 = vunpack.c.l.b16 %v1044
    %v1820 = vunpack.c.l.b16 %v1045
    %v1821 = vunpack.c.l.b16 %v1046
    %v1822 = vunpack.c.l.b16 %v1047
    %v1823 = vunpack.c.l.b16 %v1048
    %v1824 = vunpack.c.l.b16 %v1049
    %v1825 = vunpack.c.l.b16 %v1050
    %v1826 = vunpack.c.l.b16 %v1051
    %v1827 = vunpack.c.l.b16 %v1052
    %v1828 = vunpack.c.l.b16 %v1053
    %v1829 = vunpack.c.l.b16 %v1054
    %v1830 = vunpack.c.l.b16 %v1055
    %v1831 = vunpack.c.l.b16 %v1056
    %v1832 = vunpack.c.l.b16 %v1057
    %v1833 = vunpack.c.l.b16 %v1058
    %v1834 = vunpack.c.l.b16 %v1059
    %v1835 = vunpack.c.l.b16 %v1060
    %v1836 = vunpack.c.l.b16 %v1061
    %v1837 = vunpack.c.l.b16 %v1062
    %v1838 = vunpack.c.l.b16 %v1063
    %v1839 = vunpack.c.l.b16 %v1064
    %v1840 = vunpack.c.l.b16 %v1065
    %v1841 = vunpack.c.l.b16 %v1066
    %v1842 = vpack.c.b16 %v1459, %v1458
    %v1843 = vpack.c.b16 %v1461, %v1460
    %v1844 = vpack.c.b16 %v1463, %v1462
    %v1845 = vpack.c.b16 %v1465, %v1464
    %v1846 = vpack.c.b16 %v1467, %v1466
    %v1847 = vpack.c.b16 %v1469, %v1468
    %v1848 = vpack.c.b16 %v1471, %v1470
    %v1849 = vpack.c.b16 %v1473, %v1472
    %v1850 = vpack.c.b16 %v1475, %v1474
    %v1851 = vpack.c.b16 %v1477, %v1476
    %v1852 = vpack.c.b16 %v1479, %v1478
    %v1853 = vpack.c.b16 %v1481, %v1480
    %v1854 = vpack.c.b16 %v1483, %v1482
    %v1855 = vpack.c.b16 %v1485, %v1484
    %v1856 = vpack.c.b16 %v1487, %v1486
    %v1857 = vpack.c.b16 %v1489, %v1488
    %v1858 = vpack.c.b16 %v1491, %v1490
    %v1859 = vpack.c.b16 %v1493, %v1492
    %v1860 = vpack.c.b16 %v1495, %v1494
    %v1861 = vpack.c.b16 %v1497, %v1496
    %v1862 = vpack.c.b16 %v1499, %v1498
    %v1863 = vpack.c.b16 %v1501, %v1500
    %v1864 = vpack.c.b16 %v1503, %v1502
    %v1865 = vpack.c.b16 %v1505, %v1504
    %v1866 = vpack.c.b16 %v1507, %v1506
    %v1867 = vpack.c.b16 %v1509, %v1508
    %v1868 = vpack.c.b16 %v1511, %v1510
    %v1869 = vpack.c.b16 %v1513, %v1512
    %v1870 = vpack.c.b16 %v1515, %v1514
    %v1871 = vpack.c.b16 %v1517, %v1516
    %v1872 = vpack.c.b16 %v1519, %v1518
    %v1873 = vpack.c.b16 %v1521, %v1520
    %v1874 = vpack.c.b16 %v1523, %v1522
    %v1875 = vpack.c.b16 %v1525, %v1524
    %v1876 = vpack.c.b16 %v1527, %v1526
    %v1877 = vpack.c.b16 %v1529, %v1528
    %v1878 = vpack.c.b16 %v1531, %v1530
    %v1879 = vpack.c.b16 %v1533, %v1532
    %v1880 = vpack.c.b16 %v1535, %v1534
    %v1881 = vpack.c.b16 %v1537, %v1536
    %v1882 = vpack.c.b16 %v1539, %v1538
    %v1883 = vpack.c.b16 %v1541, %v1540
    %v1884 = vpack.c.b16 %v1543, %v1542
    %v1885 = vpack.c.b16 %v1545, %v1544
    %v1886 = vpack.c.b16 %v1547, %v1546
    %v1887 = vpack.c.b16 %v1549, %v1548
    %v1888 = vpack.c.b16 %v1551, %v1550
    %v1889 = vpack.c.b16 %v1553, %v1552
    %v1890 = vpack.c.b16 %v1555, %v1554
    %v1891 = vpack.c.b16 %v1557, %v1556
    %v1892 = vpack.c.b16 %v1559, %v1558
    %v1893 = vpack.c.b16 %v1561, %v1560
    %v1894 = vpack.c.b16 %v1563, %v1562
    %v1895 = vpack.c.b16 %v1565, %v1564
    %v1896 = vpack.c.b16 %v1567, %v1566
    %v1897 = vpack.c.b16 %v1569, %v1568
    %v1898 = vpack.c.b16 %v1571, %v1570
    %v1899 = vpack.c.b16 %v1573, %v1572
    %v1900 = vpack.c.b16 %v1575, %v1574
    %v1901 = vpack.c.b16 %v1577, %v1576
    %v1902 = vpack.c.b16 %v1579, %v1578
    %v1903 = vpack.c.b16 %v1581, %v1580
    %v1904 = vpack.c.b16 %v1583, %v1582
    %v1905 = vpack.c.b16 %v1585, %v1584
    %v1906 = vpack.c.b16 %v1587, %v1586
    %v1907 = vpack.c.b16 %v1589, %v1588
    %v1908 = vpack.c.b16 %v1591, %v1590
    %v1909 = vpack.c.b16 %v1593, %v1592
    %v1910 = vpack.c.b16 %v1595, %v1594
    %v1911 = vpack.c.b16 %v1597, %v1596
    %v1912 = vpack.c.b16 %v1599, %v1598
    %v1913 = vpack.c.b16 %v1601, %v1600
    %v1914 = vpack.c.b16 %v1603, %v1602
    %v1915 = vpack.c.b16 %v1605, %v1604
    %v1916 = vpack.c.b16 %v1607, %v1606
    %v1917 = vpack.c.b16 %v1609, %v1608
    %v1918 = vpack.c.b16 %v1611, %v1610
    %v1919 = vpack.c.b16 %v1613, %v1612
    %v1920 = vpack.c.b16 %v1615, %v1614
    %v1921 = vpack.c.b16 %v1617, %v1616
    %v1922 = vpack.c.b16 %v1619, %v1618
    %v1923 = vpack.c.b16 %v1621, %v1620
    %v1924 = vpack.c.b16 %v1623, %v1622
    %v1925 = vpack.c.b16 %v1625, %v1624
    %v1926 = vpack.c.b16 %v1627, %v1626
    %v1927 = vpack.c.b16 %v1629, %v1628
    %v1928 = vpack.c.b16 %v1631, %v1630
    %v1929 = vpack.c.b16 %v1633, %v1632
    %v1930 = vpack.c.b16 %v1635, %v1634
    %v1931 = vpack.c.b16 %v1637, %v1636
    %v1932 = vpack.c.b16 %v1639, %v1638
    %v1933 = vpack.c.b16 %v1641, %v1640
    %v1934 = vpack.c.b16 %v1643, %v1642
    %v1935 = vpack.c.b16 %v1645, %v1644
    %v1936 = vpack.c.b16 %v1647, %v1646
    %v1937 = vpack.c.b16 %v1649, %v1648
    %v1938 = vpack.c.b16 %v1651, %v1650
    %v1939 = vpack.c.b16 %v1653, %v1652
    %v1940 = vpack.c.b16 %v1655, %v1654
    %v1941 = vpack.c.b16 %v1657, %v1656
    %v1942 = vpack.c.b16 %v1659, %v1658
    %v1943 = vpack.c.b16 %v1661, %v1660
    %v1944 = vpack.c.b16 %v1663, %v1662
    %v1945 = vpack.c.b16 %v1665, %v1664
    %v1946 = vpack.c.b16 %v1667, %v1666
    %v1947 = vpack.c.b16 %v1669, %v1668
    %v1948 = vpack.c.b16 %v1671, %v1670
    %v1949 = vpack.c.b16 %v1673, %v1672
    %v1950 = vpack.c.b16 %v1675, %v1674
    %v1951 = vpack.c.b16 %v1677, %v1676
    %v1952 = vpack.c.b16 %v1679, %v1678
    %v1953 = vpack.c.b16 %v1681, %v1680
    %v1954 = vpack.c.b16 %v1683, %v1682
    %v1955 = vpack.c.b16 %v1685, %v1684
    %v1956 = vpack.c.b16 %v1687, %v1686
    %v1957 = vpack.c.b16 %v1689, %v1688
    %v1958 = vpack.c.b16 %v1691, %v1690
    %v1959 = vpack.c.b16 %v1693, %v1692
    %v1960 = vpack.c.b16 %v1695, %v1694
    %v1961 = vpack.c.b16 %v1697, %v1696
    %v1962 = vpack.c.b16 %v1699, %v1698
    %v1963 = vpack.c.b16 %v1701, %v1700
    %v1964 = vpack.c.b16 %v1703, %v1702
    %v1965 = vpack.c.b16 %v1705, %v1704
    %v1966 = vpack.c.b16 %v1707, %v1706
    %v1967 = vpack.c.b16 %v1709, %v1708
    %v1968 = vpack.c.b16 %v1711, %v1710
    %v1969 = vpack.c.b16 %v1713, %v1712
    %v1970 = vpack.c.b16 %v1715, %v1714
    %v1971 = vpack.c.b16 %v1717, %v1716
    %v1972 = vpack.c.b16 %v1719, %v1718
    %v1973 = vpack.c.b16 %v1721, %v1720
    %v1974 = vpack.c.b16 %v1723, %v1722
    %v1975 = vpack.c.b16 %v1725, %v1724
    %v1976 = vpack.c.b16 %v1727, %v1726
    %v1977 = vpack.c.b16 %v1729, %v1728
    %v1978 = vpack.c.b16 %v1731, %v1730
    %v1979 = vpack.c.b16 %v1733, %v1732
    %v1980 = vpack.c.b16 %v1735, %v1734
    %v1981 = vpack.c.b16 %v1737, %v1736
    %v1982 = vpack.c.b16 %v1739, %v1738
    %v1983 = vpack.c.b16 %v1741, %v1740
    %v1984 = vpack.c.b16 %v1743, %v1742
    %v1985 = vpack.c.b16 %v1745, %v1744
    %v1986 = vpack.c.b16 %v1747, %v1746
    %v1987 = vpack.c.b16 %v1749, %v1748
    %v1988 = vpack.c.b16 %v1751, %v1750
    %v1989 = vpack.c.b16 %v1753, %v1752
    %v1990 = vpack.c.b16 %v1755, %v1754
    %v1991 = vpack.c.b16 %v1757, %v1756
    %v1992 = vpack.c.b16 %v1759, %v1758
    %v1993 = vpack.c.b16 %v1761, %v1760
    %v1994 = vpack.c.b16 %v1763, %v1762
    %v1995 = vpack.c.b16 %v1765, %v1764
    %v1996 = vpack.c.b16 %v1767, %v1766
    %v1997 = vpack.c.b16 %v1769, %v1768
    %v1998 = vpack.c.b16 %v1771, %v1770
    %v1999 = vpack.c.b16 %v1773, %v1772
    %v2000 = vpack.c.b16 %v1775, %v1774
    %v2001 = vpack.c.b16 %v1777, %v1776
    %v2002 = vpack.c.b16 %v1779, %v1778
    %v2003 = vpack.c.b16 %v1781, %v1780
    %v2004 = vpack.c.b16 %v1783, %v1782
    %v2005 = vpack.c.b16 %v1785, %v1784
    %v2006 = vpack.c.b16 %v1787, %v1786
    %v2007 = vpack.c.b16 %v1789, %v1788
    %v2008 = vpack.c.b16 %v1791, %v1790
    %v2009 = vpack.c.b16 %v1793, %v1792
    %v2010 = vpack.c.b16 %v1795, %v1794
    %v2011 = vpack.c.b16 %v1797, %v1796
    %v2012 = vpack.c.b16 %v1799, %v1798
    %v2013 = vpack.c.b16 %v1801, %v1800
    %v2014 = vpack.c.b16 %v1803, %v1802
    %v2015 = vpack.c.b16 %v1805, %v1804
    %v2016 = vpack.c.b16 %v1807, %v1806
    %v2017 = vpack.c.b16 %v1809, %v1808
    %v2018 = vpack.c.b16 %v1811, %v1810
    %v2019 = vpack.c.b16 %v1813, %v1812
    %v2020 = vpack.c.b16 %v1815, %v1814
    %v2021 = vpack.c.b16 %v1817, %v1816
    %v2022 = vpack.c.b16 %v1819, %v1818
    %v2023 = vpack.c.b16 %v1821, %v1820
    %v2024 = vpack.c.b16 %v1823, %v1822
    %v2025 = vpack.c.b16 %v1825, %v1824
    %v2026 = vpack.c.b16 %v1827, %v1826
    %v2027 = vpack.c.b16 %v1829, %v1828
    %v2028 = vpack.c.b16 %v1831, %v1830
    %v2029 = vpack.c.b16 %v1833, %v1832
    %v2030 = vpack.c.b16 %v1835, %v1834
    %v2031 = vpack.c.b16 %v1837, %v1836
    %v2032 = vpack.c.b16 %v1839, %v1838
    %v2033 = vpack.c.b16 %v1841, %v1840
    %2226 = vmatprep.subr.bf16.mxu0 0
    %2227 = vmatpush1.bf16.msra.mxu0 %v1842
    %2228 = vmatprep.subr.bf16.mxu0 0
    %2229 = vmatpush1.bf16.msra.mxu0 %v1843
    %2230 = vmatprep.subr.bf16.mxu0 0
    %2231 = vmatpush1.bf16.msra.mxu0 %v1844
    %2232 = vmatprep.subr.bf16.mxu0 0
    %2233 = vmatpush1.bf16.msra.mxu0 %v1845
    %2234 = vmatprep.subr.bf16.mxu0 0
    %2235 = vmatpush1.bf16.msra.mxu0 %v1846
    %2236 = vmatprep.subr.bf16.mxu0 0
    %2237 = vmatpush1.bf16.msra.mxu0 %v1847
    %2238 = vmatprep.subr.bf16.mxu0 0
    %2239 = vmatpush1.bf16.msra.mxu0 %v1848
    %2240 = vmatprep.subr.bf16.mxu0 0
    %2241 = vmatpush1.bf16.msra.mxu0 %v1849
    %2242 = vmatprep.subr.bf16.mxu0 0
    %2243 = vmatpush1.bf16.msra.mxu0 %v1850
    %2244 = vmatprep.subr.bf16.mxu0 0
    %2245 = vmatpush1.bf16.msra.mxu0 %v1851
    %2246 = vmatprep.subr.bf16.mxu0 0
    %2247 = vmatpush1.bf16.msra.mxu0 %v1852
    %2248 = vmatprep.subr.bf16.mxu0 0
    %2249 = vmatpush1.bf16.msra.mxu0 %v1853
    %2250 = vmatprep.subr.bf16.mxu0 0
    %2251 = vmatpush1.bf16.msra.mxu0 %v1854
    %2252 = vmatprep.subr.bf16.mxu0 0
    %2253 = vmatpush1.bf16.msra.mxu0 %v1855
    %2254 = vmatprep.subr.bf16.mxu0 0
    %2255 = vmatpush1.bf16.msra.mxu0 %v1856
    %2256 = vmatprep.subr.bf16.mxu0 0
    %2257 = vmatpush1.bf16.msra.mxu0 %v1857
    %2258 = vmatprep.mubr.bf16.mxu0 %v660
    %2259 = vmatmul.mubr.bf16.gmra.mrb[0].mxu0 %v659
    %v2260 = vpop.f32.mrb[0].mxu0
    %v2261 = vadd.f32 %v1072, %v2260
    %v2262 = vpop.f32.mrb[0].mxu0
    %v2263 = vpop.f32.mrb[0].mxu0
    %v2264 = vadd.f32 %v1072, %v2263
    %v2265 = vpop.f32.mrb[0].mxu0
    %2266 = vdwg.mxu0
    %2267 = vmatprep.subr.bf16.mxu0 0
    %2268 = vmatpush1.bf16.msra.mxu0 %v1858
    %2269 = vmatprep.subr.bf16.mxu0 0
    %2270 = vmatpush1.bf16.msra.mxu0 %v1859
    %2271 = vmatprep.subr.bf16.mxu0 0
    %2272 = vmatpush1.bf16.msra.mxu0 %v1860
    %2273 = vmatprep.subr.bf16.mxu0 0
    %2274 = vmatpush1.bf16.msra.mxu0 %v1861
    %2275 = vmatprep.subr.bf16.mxu0 0
    %2276 = vmatpush1.bf16.msra.mxu0 %v1862
    %2277 = vmatprep.subr.bf16.mxu0 0
    %2278 = vmatpush1.bf16.msra.mxu0 %v1863
    %2279 = vmatprep.subr.bf16.mxu0 0
    %2280 = vmatpush1.bf16.msra.mxu0 %v1864
    %2281 = vmatprep.subr.bf16.mxu0 0
    %2282 = vmatpush1.bf16.msra.mxu0 %v1865
    %2283 = vmatprep.subr.bf16.mxu0 0
    %2284 = vmatpush1.bf16.msra.mxu0 %v1866
    %2285 = vmatprep.subr.bf16.mxu0 0
    %2286 = vmatpush1.bf16.msra.mxu0 %v1867
    %2287 = vmatprep.subr.bf16.mxu0 0
    %2288 = vmatpush1.bf16.msra.mxu0 %v1868
    %2289 = vmatprep.subr.bf16.mxu0 0
    %2290 = vmatpush1.bf16.msra.mxu0 %v1869
    %2291 = vmatprep.subr.bf16.mxu0 0
    %2292 = vmatpush1.bf16.msra.mxu0 %v1870
    %2293 = vmatprep.subr.bf16.mxu0 0
    %2294 = vmatpush1.bf16.msra.mxu0 %v1871
    %2295 = vmatprep.subr.bf16.mxu0 0
    %2296 = vmatpush1.bf16.msra.mxu0 %v1872
    %2297 = vmatprep.subr.bf16.mxu0 0
    %2298 = vmatpush1.bf16.msra.mxu0 %v1873
    %2299 = vmatprep.mubr.bf16.mxu0 %v662
    %2300 = vmatmul.mubr.bf16.gmra.mrb[0].mxu0 %v661
    %v2301 = vpop.f32.mrb[0].mxu0
    %v2302 = vadd.f32 %v2261, %v2301
    %v2303 = vpop.f32.mrb[0].mxu0
    %v2304 = vpop.f32.mrb[0].mxu0
    %v2305 = vadd.f32 %v2264, %v2304
    %v2306 = vpop.f32.mrb[0].mxu0
    %2307 = vdwg.mxu0
    %2308 = vmatprep.subr.bf16.mxu0 0
    %2309 = vmatpush1.bf16.msra.mxu0 %v1874
    %2310 = vmatprep.subr.bf16.mxu0 0
    %2311 = vmatpush1.bf16.msra.mxu0 %v1875
    %2312 = vmatprep.subr.bf16.mxu0 0
    %2313 = vmatpush1.bf16.msra.mxu0 %v1876
    %2314 = vmatprep.subr.bf16.mxu0 0
    %2315 = vmatpush1.bf16.msra.mxu0 %v1877
    %2316 = vmatprep.subr.bf16.mxu0 0
    %2317 = vmatpush1.bf16.msra.mxu0 %v1878
    %2318 = vmatprep.subr.bf16.mxu0 0
    %2319 = vmatpush1.bf16.msra.mxu0 %v1879
    %2320 = vmatprep.subr.bf16.mxu0 0
    %2321 = vmatpush1.bf16.msra.mxu0 %v1880
    %2322 = vmatprep.subr.bf16.mxu0 0
    %2323 = vmatpush1.bf16.msra.mxu0 %v1881
    %2324 = vmatprep.subr.bf16.mxu0 0
    %2325 = vmatpush1.bf16.msra.mxu0 %v1882
    %2326 = vmatprep.subr.bf16.mxu0 0
    %2327 = vmatpush1.bf16.msra.mxu0 %v1883
    %2328 = vmatprep.subr.bf16.mxu0 0
    %2329 = vmatpush1.bf16.msra.mxu0 %v1884
    %2330 = vmatprep.subr.bf16.mxu0 0
    %2331 = vmatpush1.bf16.msra.mxu0 %v1885
    %2332 = vmatprep.subr.bf16.mxu0 0
    %2333 = vmatpush1.bf16.msra.mxu0 %v1886
    %2334 = vmatprep.subr.bf16.mxu0 0
    %2335 = vmatpush1.bf16.msra.mxu0 %v1887
    %2336 = vmatprep.subr.bf16.mxu0 0
    %2337 = vmatpush1.bf16.msra.mxu0 %v1888
    %2338 = vmatprep.subr.bf16.mxu0 0
    %2339 = vmatpush1.bf16.msra.mxu0 %v1889
    %2340 = vmatprep.mubr.bf16.mxu0 %v664
    %2341 = vmatmul.mubr.bf16.gmra.mrb[0].mxu0 %v663
    %v2342 = vpop.f32.mrb[0].mxu0
    %v2343 = vadd.f32 %v2302, %v2342
    %v2344 = vpop.f32.mrb[0].mxu0
    %v2345 = vpop.f32.mrb[0].mxu0
    %v2346 = vadd.f32 %v2305, %v2345
    %v2347 = vpop.f32.mrb[0].mxu0
    %2348 = vdwg.mxu0
    %2349 = vmatprep.subr.bf16.mxu0 0
    %2350 = vmatpush1.bf16.msra.mxu0 %v1890
    %2351 = vmatprep.subr.bf16.mxu0 0
    %2352 = vmatpush1.bf16.msra.mxu0 %v1891
    %2353 = vmatprep.subr.bf16.mxu0 0
    %2354 = vmatpush1.bf16.msra.mxu0 %v1892
    %2355 = vmatprep.subr.bf16.mxu0 0
    %2356 = vmatpush1.bf16.msra.mxu0 %v1893
    %2357 = vmatprep.subr.bf16.mxu0 0
    %2358 = vmatpush1.bf16.msra.mxu0 %v1894
    %2359 = vmatprep.subr.bf16.mxu0 0
    %2360 = vmatpush1.bf16.msra.mxu0 %v1895
    %2361 = vmatprep.subr.bf16.mxu0 0
    %2362 = vmatpush1.bf16.msra.mxu0 %v1896
    %2363 = vmatprep.subr.bf16.mxu0 0
    %2364 = vmatpush1.bf16.msra.mxu0 %v1897
    %2365 = vmatprep.subr.bf16.mxu0 0
    %2366 = vmatpush1.bf16.msra.mxu0 %v1898
    %2367 = vmatprep.subr.bf16.mxu0 0
    %2368 = vmatpush1.bf16.msra.mxu0 %v1899
    %2369 = vmatprep.subr.bf16.mxu0 0
    %2370 = vmatpush1.bf16.msra.mxu0 %v1900
    %2371 = vmatprep.subr.bf16.mxu0 0
    %2372 = vmatpush1.bf16.msra.mxu0 %v1901
    %2373 = vmatprep.subr.bf16.mxu0 0
    %2374 = vmatpush1.bf16.msra.mxu0 %v1902
    %2375 = vmatprep.subr.bf16.mxu0 0
    %2376 = vmatpush1.bf16.msra.mxu0 %v1903
    %2377 = vmatprep.subr.bf16.mxu0 0
    %2378 = vmatpush1.bf16.msra.mxu0 %v1904
    %2379 = vmatprep.subr.bf16.mxu0 0
    %2380 = vmatpush1.bf16.msra.mxu0 %v1905
    %2381 = vmatprep.mubr.bf16.mxu0 %v666
    %2382 = vmatmul.mubr.bf16.gmra.mrb[0].mxu0 %v665
    %v2383 = vpop.f32.mrb[0].mxu0
    %v2384 = vadd.f32 %v2343, %v2383
    %v2385 = vpop.f32.mrb[0].mxu0
    %v2386 = vpop.f32.mrb[0].mxu0
    %v2387 = vadd.f32 %v2346, %v2386
    %v2388 = vpop.f32.mrb[0].mxu0
    %2389 = vdwg.mxu0
    %2390 = vmatprep.subr.bf16.mxu0 0
    %2391 = vmatpush1.bf16.msra.mxu0 %v1906
    %2392 = vmatprep.subr.bf16.mxu0 0
    %2393 = vmatpush1.bf16.msra.mxu0 %v1907
    %2394 = vmatprep.subr.bf16.mxu0 0
    %2395 = vmatpush1.bf16.msra.mxu0 %v1908
    %2396 = vmatprep.subr.bf16.mxu0 0
    %2397 = vmatpush1.bf16.msra.mxu0 %v1909
    %2398 = vmatprep.subr.bf16.mxu0 0
    %2399 = vmatpush1.bf16.msra.mxu0 %v1910
    %2400 = vmatprep.subr.bf16.mxu0 0
    %2401 = vmatpush1.bf16.msra.mxu0 %v1911
    %2402 = vmatprep.subr.bf16.mxu0 0
    %2403 = vmatpush1.bf16.msra.mxu0 %v1912
    %2404 = vmatprep.subr.bf16.mxu0 0
    %2405 = vmatpush1.bf16.msra.mxu0 %v1913
    %2406 = vmatprep.subr.bf16.mxu0 0
    %2407 = vmatpush1.bf16.msra.mxu0 %v1914
    %2408 = vmatprep.subr.bf16.mxu0 0
    %2409 = vmatpush1.bf16.msra.mxu0 %v1915
    %2410 = vmatprep.subr.bf16.mxu0 0
    %2411 = vmatpush1.bf16.msra.mxu0 %v1916
    %2412 = vmatprep.subr.bf16.mxu0 0
    %2413 = vmatpush1.bf16.msra.mxu0 %v1917
    %2414 = vmatprep.subr.bf16.mxu0 0
    %2415 = vmatpush1.bf16.msra.mxu0 %v1918
    %2416 = vmatprep.subr.bf16.mxu0 0
    %2417 = vmatpush1.bf16.msra.mxu0 %v1919
    %2418 = vmatprep.subr.bf16.mxu0 0
    %2419 = vmatpush1.bf16.msra.mxu0 %v1920
    %2420 = vmatprep.subr.bf16.mxu0 0
    %2421 = vmatpush1.bf16.msra.mxu0 %v1921
    %2422 = vmatprep.mubr.bf16.mxu0 %v668
    %2423 = vmatmul.mubr.bf16.gmra.mrb[0].mxu0 %v667
    %v2424 = vpop.f32.mrb[0].mxu0
    %v2425 = vadd.f32 %v2384, %v2424
    %v2426 = vpop.f32.mrb[0].mxu0
    %v2427 = vpop.f32.mrb[0].mxu0
    %v2428 = vadd.f32 %v2387, %v2427
    %v2429 = vpop.f32.mrb[0].mxu0
    %2430 = vdwg.mxu0
    %2431 = vmatprep.subr.bf16.mxu0 0
    %2432 = vmatpush1.bf16.msra.mxu0 %v1922
    %2433 = vmatprep.subr.bf16.mxu0 0
    %2434 = vmatpush1.bf16.msra.mxu0 %v1923
    %2435 = vmatprep.subr.bf16.mxu0 0
    %2436 = vmatpush1.bf16.msra.mxu0 %v1924
    %2437 = vmatprep.subr.bf16.mxu0 0
    %2438 = vmatpush1.bf16.msra.mxu0 %v1925
    %2439 = vmatprep.subr.bf16.mxu0 0
    %2440 = vmatpush1.bf16.msra.mxu0 %v1926
    %2441 = vmatprep.subr.bf16.mxu0 0
    %2442 = vmatpush1.bf16.msra.mxu0 %v1927
    %2443 = vmatprep.subr.bf16.mxu0 0
    %2444 = vmatpush1.bf16.msra.mxu0 %v1928
    %2445 = vmatprep.subr.bf16.mxu0 0
    %2446 = vmatpush1.bf16.msra.mxu0 %v1929
    %2447 = vmatprep.subr.bf16.mxu0 0
    %2448 = vmatpush1.bf16.msra.mxu0 %v1930
    %2449 = vmatprep.subr.bf16.mxu0 0
    %2450 = vmatpush1.bf16.msra.mxu0 %v1931
    %2451 = vmatprep.subr.bf16.mxu0 0
    %2452 = vmatpush1.bf16.msra.mxu0 %v1932
    %2453 = vmatprep.subr.bf16.mxu0 0
    %2454 = vmatpush1.bf16.msra.mxu0 %v1933
    %2455 = vmatprep.subr.bf16.mxu0 0
    %2456 = vmatpush1.bf16.msra.mxu0 %v1934
    %2457 = vmatprep.subr.bf16.mxu0 0
    %2458 = vmatpush1.bf16.msra.mxu0 %v1935
    %2459 = vmatprep.subr.bf16.mxu0 0
    %2460 = vmatpush1.bf16.msra.mxu0 %v1936
    %2461 = vmatprep.subr.bf16.mxu0 0
    %2462 = vmatpush1.bf16.msra.mxu0 %v1937
    %2463 = vmatprep.mubr.bf16.mxu0 %v670
    %2464 = vmatmul.mubr.bf16.gmra.mrb[0].mxu0 %v669
    %v2465 = vpop.f32.mrb[0].mxu0
    %v2466 = vadd.f32 %v2425, %v2465
    %v2467 = vpop.f32.mrb[0].mxu0
    %v2468 = vpop.f32.mrb[0].mxu0
    %v2469 = vadd.f32 %v2428, %v2468
    %v2470 = vpop.f32.mrb[0].mxu0
    %2471 = vdwg.mxu0
    %2472 = vmatprep.subr.bf16.mxu0 0
    %2473 = vmatpush1.bf16.msra.mxu0 %v1938
    %2474 = vmatprep.subr.bf16.mxu0 0
    %2475 = vmatpush1.bf16.msra.mxu0 %v1939
    %2476 = vmatprep.subr.bf16.mxu0 0
    %2477 = vmatpush1.bf16.msra.mxu0 %v1940
    %2478 = vmatprep.subr.bf16.mxu0 0
    %2479 = vmatpush1.bf16.msra.mxu0 %v1941
    %2480 = vmatprep.subr.bf16.mxu0 0
    %2481 = vmatpush1.bf16.msra.mxu0 %v1942
    %2482 = vmatprep.subr.bf16.mxu0 0
    %2483 = vmatpush1.bf16.msra.mxu0 %v1943
    %2484 = vmatprep.subr.bf16.mxu0 0
    %2485 = vmatpush1.bf16.msra.mxu0 %v1944
    %2486 = vmatprep.subr.bf16.mxu0 0
    %2487 = vmatpush1.bf16.msra.mxu0 %v1945
    %2488 = vmatprep.subr.bf16.mxu0 0
    %2489 = vmatpush1.bf16.msra.mxu0 %v1946
    %2490 = vmatprep.subr.bf16.mxu0 0
    %2491 = vmatpush1.bf16.msra.mxu0 %v1947
    %2492 = vmatprep.subr.bf16.mxu0 0
    %2493 = vmatpush1.bf16.msra.mxu0 %v1948
    %2494 = vmatprep.subr.bf16.mxu0 0
    %2495 = vmatpush1.bf16.msra.mxu0 %v1949
    %2496 = vmatprep.subr.bf16.mxu0 0
    %2497 = vmatpush1.bf16.msra.mxu0 %v1950
    %2498 = vmatprep.subr.bf16.mxu0 0
    %2499 = vmatpush1.bf16.msra.mxu0 %v1951
    %2500 = vmatprep.subr.bf16.mxu0 0
    %2501 = vmatpush1.bf16.msra.mxu0 %v1952
    %2502 = vmatprep.subr.bf16.mxu0 0
    %2503 = vmatpush1.bf16.msra.mxu0 %v1953
    %2504 = vmatprep.mubr.bf16.mxu0 %v672
    %2505 = vmatmul.mubr.bf16.gmra.mrb[0].mxu0 %v671
    %v2506 = vpop.f32.mrb[0].mxu0
    %v2507 = vadd.f32 %v2466, %v2506
    %v2508 = vpop.f32.mrb[0].mxu0
    %v2509 = vpop.f32.mrb[0].mxu0
    %v2510 = vadd.f32 %v2469, %v2509
    %v2511 = vpop.f32.mrb[0].mxu0
    %2512 = vdwg.mxu0
    %2513 = vmatprep.subr.bf16.mxu0 0
    %2514 = vmatpush1.bf16.msra.mxu0 %v1954
    %2515 = vmatprep.subr.bf16.mxu0 0
    %2516 = vmatpush1.bf16.msra.mxu0 %v1955
    %2517 = vmatprep.subr.bf16.mxu0 0
    %2518 = vmatpush1.bf16.msra.mxu0 %v1956
    %2519 = vmatprep.subr.bf16.mxu0 0
    %2520 = vmatpush1.bf16.msra.mxu0 %v1957
    %2521 = vmatprep.subr.bf16.mxu0 0
    %2522 = vmatpush1.bf16.msra.mxu0 %v1958
    %2523 = vmatprep.subr.bf16.mxu0 0
    %2524 = vmatpush1.bf16.msra.mxu0 %v1959
    %2525 = vmatprep.subr.bf16.mxu0 0
    %2526 = vmatpush1.bf16.msra.mxu0 %v1960
    %2527 = vmatprep.subr.bf16.mxu0 0
    %2528 = vmatpush1.bf16.msra.mxu0 %v1961
    %2529 = vmatprep.subr.bf16.mxu0 0
    %2530 = vmatpush1.bf16.msra.mxu0 %v1962
    %2531 = vmatprep.subr.bf16.mxu0 0
    %2532 = vmatpush1.bf16.msra.mxu0 %v1963
    %2533 = vmatprep.subr.bf16.mxu0 0
    %2534 = vmatpush1.bf16.msra.mxu0 %v1964
    %2535 = vmatprep.subr.bf16.mxu0 0
    %2536 = vmatpush1.bf16.msra.mxu0 %v1965
    %2537 = vmatprep.subr.bf16.mxu0 0
    %2538 = vmatpush1.bf16.msra.mxu0 %v1966
    %2539 = vmatprep.subr.bf16.mxu0 0
    %2540 = vmatpush1.bf16.msra.mxu0 %v1967
    %2541 = vmatprep.subr.bf16.mxu0 0
    %2542 = vmatpush1.bf16.msra.mxu0 %v1968
    %2543 = vmatprep.subr.bf16.mxu0 0
    %2544 = vmatpush1.bf16.msra.mxu0 %v1969
    %2545 = vmatprep.mubr.bf16.mxu0 %v674
    %2546 = vmatmul.mubr.bf16.gmra.mrb[0].mxu0 %v673
    %v2547 = vpop.f32.mrb[0].mxu0
    %v2548 = vadd.f32 %v2507, %v2547
    %v2549 = vpop.f32.mrb[0].mxu0
    %v2550 = vpop.f32.mrb[0].mxu0
    %v2551 = vadd.f32 %v2510, %v2550
    %v2552 = vpop.f32.mrb[0].mxu0
    %2553 = vdwg.mxu0
    %2554 = vmatprep.subr.bf16.mxu0 0
    %2555 = vmatpush1.bf16.msra.mxu0 %v1970
    %2556 = vmatprep.subr.bf16.mxu0 0
    %2557 = vmatpush1.bf16.msra.mxu0 %v1971
    %2558 = vmatprep.subr.bf16.mxu0 0
    %2559 = vmatpush1.bf16.msra.mxu0 %v1972
    %2560 = vmatprep.subr.bf16.mxu0 0
    %2561 = vmatpush1.bf16.msra.mxu0 %v1973
    %2562 = vmatprep.subr.bf16.mxu0 0
    %2563 = vmatpush1.bf16.msra.mxu0 %v1974
    %2564 = vmatprep.subr.bf16.mxu0 0
    %2565 = vmatpush1.bf16.msra.mxu0 %v1975
    %2566 = vmatprep.subr.bf16.mxu0 0
    %2567 = vmatpush1.bf16.msra.mxu0 %v1976
    %2568 = vmatprep.subr.bf16.mxu0 0
    %2569 = vmatpush1.bf16.msra.mxu0 %v1977
    %2570 = vmatprep.subr.bf16.mxu0 0
    %2571 = vmatpush1.bf16.msra.mxu0 %v1978
    %2572 = vmatprep.subr.bf16.mxu0 0
    %2573 = vmatpush1.bf16.msra.mxu0 %v1979
    %2574 = vmatprep.subr.bf16.mxu0 0
    %2575 = vmatpush1.bf16.msra.mxu0 %v1980
    %2576 = vmatprep.subr.bf16.mxu0 0
    %2577 = vmatpush1.bf16.msra.mxu0 %v1981
    %2578 = vmatprep.subr.bf16.mxu0 0
    %2579 = vmatpush1.bf16.msra.mxu0 %v1982
    %2580 = vmatprep.subr.bf16.mxu0 0
    %2581 = vmatpush1.bf16.msra.mxu0 %v1983
    %2582 = vmatprep.subr.bf16.mxu0 0
    %2583 = vmatpush1.bf16.msra.mxu0 %v1984
    %2584 = vmatprep.subr.bf16.mxu0 0
    %2585 = vmatpush1.bf16.msra.mxu0 %v1985
    %2586 = vmatprep.mubr.bf16.mxu0 %v676
    %2587 = vmatmul.mubr.bf16.gmra.mrb[0].mxu0 %v675
    %v2588 = vpop.f32.mrb[0].mxu0
    %v2589 = vadd.f32 %v2548, %v2588
    %v2590 = vpop.f32.mrb[0].mxu0
    %v2591 = vpop.f32.mrb[0].mxu0
    %v2592 = vadd.f32 %v2551, %v2591
    %v2593 = vpop.f32.mrb[0].mxu0
    %2594 = vdwg.mxu0
    %2595 = vmatprep.subr.bf16.mxu0 0
    %2596 = vmatpush1.bf16.msra.mxu0 %v1986
    %2597 = vmatprep.subr.bf16.mxu0 0
    %2598 = vmatpush1.bf16.msra.mxu0 %v1987
    %2599 = vmatprep.subr.bf16.mxu0 0
    %2600 = vmatpush1.bf16.msra.mxu0 %v1988
    %2601 = vmatprep.subr.bf16.mxu0 0
    %2602 = vmatpush1.bf16.msra.mxu0 %v1989
    %2603 = vmatprep.subr.bf16.mxu0 0
    %2604 = vmatpush1.bf16.msra.mxu0 %v1990
    %2605 = vmatprep.subr.bf16.mxu0 0
    %2606 = vmatpush1.bf16.msra.mxu0 %v1991
    %2607 = vmatprep.subr.bf16.mxu0 0
    %2608 = vmatpush1.bf16.msra.mxu0 %v1992
    %2609 = vmatprep.subr.bf16.mxu0 0
    %2610 = vmatpush1.bf16.msra.mxu0 %v1993
    %2611 = vmatprep.subr.bf16.mxu0 0
    %2612 = vmatpush1.bf16.msra.mxu0 %v1994
    %2613 = vmatprep.subr.bf16.mxu0 0
    %2614 = vmatpush1.bf16.msra.mxu0 %v1995
    %2615 = vmatprep.subr.bf16.mxu0 0
    %2616 = vmatpush1.bf16.msra.mxu0 %v1996
    %2617 = vmatprep.subr.bf16.mxu0 0
    %2618 = vmatpush1.bf16.msra.mxu0 %v1997
    %2619 = vmatprep.subr.bf16.mxu0 0
    %2620 = vmatpush1.bf16.msra.mxu0 %v1998
    %2621 = vmatprep.subr.bf16.mxu0 0
    %2622 = vmatpush1.bf16.msra.mxu0 %v1999
    %2623 = vmatprep.subr.bf16.mxu0 0
    %2624 = vmatpush1.bf16.msra.mxu0 %v2000
    %2625 = vmatprep.subr.bf16.mxu0 0
    %2626 = vmatpush1.bf16.msra.mxu0 %v2001
    %2627 = vmatprep.mubr.bf16.mxu0 %v678
    %2628 = vmatmul.mubr.bf16.gmra.mrb[0].mxu0 %v677
    %v2629 = vpop.f32.mrb[0].mxu0
    %v2630 = vadd.f32 %v2589, %v2629
    %v2631 = vpop.f32.mrb[0].mxu0
    %v2632 = vpop.f32.mrb[0].mxu0
    %v2633 = vadd.f32 %v2592, %v2632
    %v2634 = vpop.f32.mrb[0].mxu0
    %2635 = vdwg.mxu0
    %2636 = vmatprep.subr.bf16.mxu0 0
    %2637 = vmatpush1.bf16.msra.mxu0 %v2002
    %2638 = vmatprep.subr.bf16.mxu0 0
    %2639 = vmatpush1.bf16.msra.mxu0 %v2003
    %2640 = vmatprep.subr.bf16.mxu0 0
    %2641 = vmatpush1.bf16.msra.mxu0 %v2004
    %2642 = vmatprep.subr.bf16.mxu0 0
    %2643 = vmatpush1.bf16.msra.mxu0 %v2005
    %2644 = vmatprep.subr.bf16.mxu0 0
    %2645 = vmatpush1.bf16.msra.mxu0 %v2006
    %2646 = vmatprep.subr.bf16.mxu0 0
    %2647 = vmatpush1.bf16.msra.mxu0 %v2007
    %2648 = vmatprep.subr.bf16.mxu0 0
    %2649 = vmatpush1.bf16.msra.mxu0 %v2008
    %2650 = vmatprep.subr.bf16.mxu0 0
    %2651 = vmatpush1.bf16.msra.mxu0 %v2009
    %2652 = vmatprep.subr.bf16.mxu0 0
    %2653 = vmatpush1.bf16.msra.mxu0 %v2010
    %2654 = vmatprep.subr.bf16.mxu0 0
    %2655 = vmatpush1.bf16.msra.mxu0 %v2011
    %2656 = vmatprep.subr.bf16.mxu0 0
    %2657 = vmatpush1.bf16.msra.mxu0 %v2012
    %2658 = vmatprep.subr.bf16.mxu0 0
    %2659 = vmatpush1.bf16.msra.mxu0 %v2013
    %2660 = vmatprep.subr.bf16.mxu0 0
    %2661 = vmatpush1.bf16.msra.mxu0 %v2014
    %2662 = vmatprep.subr.bf16.mxu0 0
    %2663 = vmatpush1.bf16.msra.mxu0 %v2015
    %2664 = vmatprep.subr.bf16.mxu0 0
    %2665 = vmatpush1.bf16.msra.mxu0 %v2016
    %2666 = vmatprep.subr.bf16.mxu0 0
    %2667 = vmatpush1.bf16.msra.mxu0 %v2017
    %2668 = vmatprep.mubr.bf16.mxu0 %v680
    %2669 = vmatmul.mubr.bf16.gmra.mrb[0].mxu0 %v679
    %v2670 = vpop.f32.mrb[0].mxu0
    %v2671 = vadd.f32 %v2630, %v2670
    %v2672 = vpop.f32.mrb[0].mxu0
    %v2673 = vpop.f32.mrb[0].mxu0
    %v2674 = vadd.f32 %v2633, %v2673
    %v2675 = vpop.f32.mrb[0].mxu0
    %2676 = vdwg.mxu0
    %2677 = vmatprep.subr.bf16.mxu0 0
    %2678 = vmatpush1.bf16.msra.mxu0 %v2018
    %2679 = vmatprep.subr.bf16.mxu0 0
    %2680 = vmatpush1.bf16.msra.mxu0 %v2019
    %2681 = vmatprep.subr.bf16.mxu0 0
    %2682 = vmatpush1.bf16.msra.mxu0 %v2020
    %2683 = vmatprep.subr.bf16.mxu0 0
    %2684 = vmatpush1.bf16.msra.mxu0 %v2021
    %2685 = vmatprep.subr.bf16.mxu0 0
    %2686 = vmatpush1.bf16.msra.mxu0 %v2022
    %2687 = vmatprep.subr.bf16.mxu0 0
    %2688 = vmatpush1.bf16.msra.mxu0 %v2023
    %2689 = vmatprep.subr.bf16.mxu0 0
    %2690 = vmatpush1.bf16.msra.mxu0 %v2024
    %2691 = vmatprep.subr.bf16.mxu0 0
    %2692 = vmatpush1.bf16.msra.mxu0 %v2025
    %2693 = vmatprep.subr.bf16.mxu0 0
    %2694 = vmatpush1.bf16.msra.mxu0 %v2026
    %2695 = vmatprep.subr.bf16.mxu0 0
    %2696 = vmatpush1.bf16.msra.mxu0 %v2027
    %2697 = vmatprep.subr.bf16.mxu0 0
    %2698 = vmatpush1.bf16.msra.mxu0 %v2028
    %2699 = vmatprep.subr.bf16.mxu0 0
    %2700 = vmatpush1.bf16.msra.mxu0 %v2029
    %2701 = vmatprep.subr.bf16.mxu0 0
    %2702 = vmatpush1.bf16.msra.mxu0 %v2030
    %2703 = vmatprep.subr.bf16.mxu0 0
    %2704 = vmatpush1.bf16.msra.mxu0 %v2031
    %2705 = vmatprep.subr.bf16.mxu0 0
    %2706 = vmatpush1.bf16.msra.mxu0 %v2032
    %2707 = vmatprep.subr.bf16.mxu0 0
    %2708 = vmatpush1.bf16.msra.mxu0 %v2033
    %2709 = vmatprep.mubr.bf16.mxu0 %v682
    %2710 = vmatmul.mubr.bf16.gmra.mrb[0].mxu0 %v681
    %v2711 = vpop.f32.mrb[0].mxu0
    %v2712 = vadd.f32 %v2671, %v2711
    %v2713 = vpop.f32.mrb[0].mxu0
    %v2714 = vpop.f32.mrb[0].mxu0
    %v2715 = vadd.f32 %v2674, %v2714
    %v2716 = vpop.f32.mrb[0].mxu0
    %2717 = vdwg.mxu0
    %v2718 = vmax.f32 %v2712, 0.0
    %v2719 = vmax.f32 %v2715, 0.0
    %v2720 = vpack.c.bf16 %v2719, %v2718
    %v2721 = vld [vmem:[#allocation7] sm:$0xf]
    %v2722 = vld [vmem:[#allocation7 + $0x4] sm:$0xf]
    %v2723 = vld [vmem:[#allocation7 + $0x8] sm:$0xf]
    %v2724 = vld [vmem:[#allocation7 + $0xc] sm:$0xf]
    %v2725 = vld [vmem:[#allocation7 + $0x10] sm:$0xf]
    %v2726 = vld [vmem:[#allocation7 + $0x14] sm:$0xf]
    %v2727 = vld [vmem:[#allocation7 + $0x18] sm:$0xf]
    %v2728 = vld [vmem:[#allocation7 + $0x1c] sm:$0xf]
    %v2729 = vld [vmem:[#allocation7 + $0x20] sm:$0xf]
    %v2730 = vld [vmem:[#allocation7 + $0x24] sm:$0xf]
    %v2731 = vld [vmem:[#allocation7 + $0x28] sm:$0xf]
    %v2732 = vld [vmem:[#allocation7 + $0x2c] sm:$0xf]
    %v2733 = vld [vmem:[#allocation7 + $0x30] sm:$0xf]
    %v2734 = vld [vmem:[#allocation7 + $0x34] sm:$0xf]
    %v2735 = vld [vmem:[#allocation7 + $0x38] sm:$0xf]
    %v2736 = vld [vmem:[#allocation7 + $0x3c] sm:$0xf]
    %v2737 = vld [vmem:[%s4] sm:$0x1]
    %v2739 = vlaneseq
    %v2740 = vshrl.u32 %v2739, 7
    %v2741 = vsub.s32 0, %v2740
    %v2742 = vrot.slane %v2737, %v2741
    %v2760 = vunpack.c.l.b16 %v2721
    %v2761 = vunpack.c.l.b16 %v2722
    %v2762 = vunpack.c.l.b16 %v2723
    %v2763 = vunpack.c.l.b16 %v2724
    %v2764 = vunpack.c.l.b16 %v2725
    %v2765 = vunpack.c.l.b16 %v2726
    %v2766 = vunpack.c.l.b16 %v2727
    %v2767 = vunpack.c.l.b16 %v2728
    %v2768 = vunpack.c.l.b16 %v2729
    %v2769 = vunpack.c.l.b16 %v2730
    %v2770 = vunpack.c.l.b16 %v2731
    %v2771 = vunpack.c.l.b16 %v2732
    %v2772 = vunpack.c.l.b16 %v2733
    %v2773 = vunpack.c.l.b16 %v2734
    %v2774 = vunpack.c.l.b16 %v2735
    %v2775 = vunpack.c.l.b16 %v2736
    %v2776 = vpack.c.b16 %v2761, %v2760
    %v2777 = vpack.c.b16 %v2763, %v2762
    %v2778 = vpack.c.b16 %v2765, %v2764
    %v2779 = vpack.c.b16 %v2767, %v2766
    %v2780 = vpack.c.b16 %v2769, %v2768
    %v2781 = vpack.c.b16 %v2771, %v2770
    %v2782 = vpack.c.b16 %v2773, %v2772
    %v2783 = vpack.c.b16 %v2775, %v2774
    %2792 = vmatprep.subr.bf16.mxu0 0
    %2793 = vmatpush1.bf16.msra.mxu0 %v2776
    %2794 = vmatprep.subr.bf16.mxu0 0
    %2795 = vmatpush1.bf16.msra.mxu0 %v2777
    %2796 = vmatprep.subr.bf16.mxu0 0
    %2797 = vmatpush1.bf16.msra.mxu0 %v2778
    %2798 = vmatprep.subr.bf16.mxu0 0
    %2799 = vmatpush1.bf16.msra.mxu0 %v2779
    %2800 = vmatprep.subr.bf16.mxu0 0
    %2801 = vmatpush1.bf16.msra.mxu0 %v2780
    %2802 = vmatprep.subr.bf16.mxu0 0
    %2803 = vmatpush1.bf16.msra.mxu0 %v2781
    %2804 = vmatprep.subr.bf16.mxu0 0
    %2805 = vmatpush1.bf16.msra.mxu0 %v2782
    %2806 = vmatprep.subr.bf16.mxu0 0
    %2807 = vmatpush1.bf16.msra.mxu0 %v2783
    %2808 = vmatprep.subr.bf16.mxu0 0
    %2809 = vmatpush1.bf16.msra.mxu0 0
    %2810 = vmatprep.subr.bf16.mxu0 0
    %2811 = vmatpush1.bf16.msra.mxu0 0
    %2812 = vmatprep.subr.bf16.mxu0 0
    %2813 = vmatpush1.bf16.msra.mxu0 0
    %2814 = vmatprep.subr.bf16.mxu0 0
    %2815 = vmatpush1.bf16.msra.mxu0 0
    %2816 = vmatprep.subr.bf16.mxu0 0
    %2817 = vmatpush1.bf16.msra.mxu0 0
    %2818 = vmatprep.subr.bf16.mxu0 0
    %2819 = vmatpush1.bf16.msra.mxu0 0
    %2820 = vmatprep.subr.bf16.mxu0 0
    %2821 = vmatpush1.bf16.msra.mxu0 0
    %2822 = vmatprep.subr.bf16.mxu0 0
    %2823 = vmatpush1.bf16.msra.mxu0 0
    %2824 = vmatprep.mubr.bf16.mxu0 0
    %2825 = vmatmul.mubr.bf16.gmra.mrb[0].mxu0 %v2720
    %v2826 = vpop.f32.mrb[0].mxu0
    %v2827 = vadd.f32 %v2742, %v2826
    %v2828 = vpop.f32.mrb[0].mxu0
    %v2829 = vpop.f32.mrb[0].mxu0
    %v2830 = vadd.f32 %v2742, %v2829
    %v2831 = vpop.f32.mrb[0].mxu0
    %2832 = vdwg.mxu0
    %v2833 = vmax.f32 %v2827, 0.0
    %v2834 = vmax.f32 %v2830, 0.0
    %v2835 = vpack.c.bf16 %v2834, %v2833
    %v2836 = vld [vmem:[#allocation8] sm:$0xf]
    %v2837 = vld [vmem:[#allocation8 + $0x4] sm:$0xf]
    %v2838 = vld [vmem:[#allocation8 + $0x8] sm:$0xf]
    %v2839 = vld [vmem:[#allocation8 + $0xc] sm:$0xf]
    %v2840 = vld [vmem:[#allocation8 + $0x10] sm:$0xf]
    %v2841 = vld [vmem:[#allocation8 + $0x14] sm:$0xf]
    %v2842 = vld [vmem:[#allocation8 + $0x18] sm:$0xf]
    %v2843 = vld [vmem:[#allocation8 + $0x1c] sm:$0xf]
    %v2844 = vld [vmem:[#allocation8 + $0x20] sm:$0xf]
    %v2845 = vld [vmem:[#allocation8 + $0x24] sm:$0xf]
    %v2846 = vld [vmem:[#allocation8 + $0x28] sm:$0xf]
    %v2847 = vld [vmem:[#allocation8 + $0x2c] sm:$0xf]
    %v2848 = vld [vmem:[#allocation8 + $0x30] sm:$0xf]
    %v2849 = vld [vmem:[#allocation8 + $0x34] sm:$0xf]
    %v2850 = vld [vmem:[#allocation8 + $0x38] sm:$0xf]
    %v2851 = vld [vmem:[#allocation8 + $0x3c] sm:$0xf]
    %v2852 = vld [vmem:[%s6] sm:$0x1]
    %v2854 = vlaneseq
    %v2855 = vshrl.u32 %v2854, 7
    %v2856 = vsub.s32 0, %v2855
    %v2857 = vrot.slane %v2852, %v2856
    %v2875 = vunpack.c.l.b16 %v2836
    %v2876 = vunpack.c.l.b16 %v2837
    %v2877 = vunpack.c.l.b16 %v2838
    %v2878 = vunpack.c.l.b16 %v2839
    %v2879 = vunpack.c.l.b16 %v2840
    %v2880 = vunpack.c.l.b16 %v2841
    %v2881 = vunpack.c.l.b16 %v2842
    %v2882 = vunpack.c.l.b16 %v2843
    %v2883 = vunpack.c.l.b16 %v2844
    %v2884 = vunpack.c.l.b16 %v2845
    %v2885 = vunpack.c.l.b16 %v2846
    %v2886 = vunpack.c.l.b16 %v2847
    %v2887 = vunpack.c.l.b16 %v2848
    %v2888 = vunpack.c.l.b16 %v2849
    %v2889 = vunpack.c.l.b16 %v2850
    %v2890 = vunpack.c.l.b16 %v2851
    %v2891 = vpack.c.b16 %v2876, %v2875
    %v2892 = vpack.c.b16 %v2878, %v2877
    %v2893 = vpack.c.b16 %v2880, %v2879
    %v2894 = vpack.c.b16 %v2882, %v2881
    %v2895 = vpack.c.b16 %v2884, %v2883
    %v2896 = vpack.c.b16 %v2886, %v2885
    %v2897 = vpack.c.b16 %v2888, %v2887
    %v2898 = vpack.c.b16 %v2890, %v2889
    %2907 = vmatprep.subr.bf16.mxu0 0
    %2908 = vmatpush1.bf16.msra.mxu0 %v2891
    %2909 = vmatprep.subr.bf16.mxu0 0
    %2910 = vmatpush1.bf16.msra.mxu0 %v2892
    %2911 = vmatprep.subr.bf16.mxu0 0
    %2912 = vmatpush1.bf16.msra.mxu0 %v2893
    %2913 = vmatprep.subr.bf16.mxu0 0
    %2914 = vmatpush1.bf16.msra.mxu0 %v2894
    %2915 = vmatprep.subr.bf16.mxu0 0
    %2916 = vmatpush1.bf16.msra.mxu0 %v2895
    %2917 = vmatprep.subr.bf16.mxu0 0
    %2918 = vmatpush1.bf16.msra.mxu0 %v2896
    %2919 = vmatprep.subr.bf16.mxu0 0
    %2920 = vmatpush1.bf16.msra.mxu0 %v2897
    %2921 = vmatprep.subr.bf16.mxu0 0
    %2922 = vmatpush1.bf16.msra.mxu0 %v2898
    %2923 = vmatprep.subr.bf16.mxu0 0
    %2924 = vmatpush1.bf16.msra.mxu0 0
    %2925 = vmatprep.subr.bf16.mxu0 0
    %2926 = vmatpush1.bf16.msra.mxu0 0
    %2927 = vmatprep.subr.bf16.mxu0 0
    %2928 = vmatpush1.bf16.msra.mxu0 0
    %2929 = vmatprep.subr.bf16.mxu0 0
    %2930 = vmatpush1.bf16.msra.mxu0 0
    %2931 = vmatprep.subr.bf16.mxu0 0
    %2932 = vmatpush1.bf16.msra.mxu0 0
    %2933 = vmatprep.subr.bf16.mxu0 0
    %2934 = vmatpush1.bf16.msra.mxu0 0
    %2935 = vmatprep.subr.bf16.mxu0 0
    %2936 = vmatpush1.bf16.msra.mxu0 0
    %2937 = vmatprep.subr.bf16.mxu0 0
    %2938 = vmatpush1.bf16.msra.mxu0 0
    %2939 = vmatprep.mubr.bf16.mxu0 0
    %2940 = vmatmul.mubr.bf16.gmra.mrb[0].mxu0 %v2835
    %v2941 = vpop.f32.mrb[0].mxu0
    %v2942 = vadd.f32 %v2857, %v2941
    %v2943 = vpop.f32.mrb[0].mxu0
    %v2944 = vpop.f32.mrb[0].mxu0
    %v2945 = vadd.f32 %v2857, %v2944
    %v2946 = vpop.f32.mrb[0].mxu0
    %2947 = vdwg.mxu0
    %v2948 = vpack.c.bf16 %v2945, %v2942
    %v2950 = vunpack.c.l.b16 %v2948
    %v2951 = vunpack.c.h.b16 %v2948
    %v2952 = vpack.c.b16 %v2950, %v2950
    %v2953 = vpack.c.b16 %v2951, %v2951
    %2956 = vst [vmem:[#allocation10] sm:$0xf] %v2952
    %2957 = vst [vmem:[#allocation10 + $0x4] sm:$0xf] %v2953
    // Predicated region
    $region46: #{tpu_custom_call.1} parent=1 // pred_check
      _
    $region47: #{tpu_custom_call.1} parent=1 // pred_check_branch
      %2959 = sbr.rel (0) target = $region49
    $region48: #{tpu_custom_call.1} parent=1 // pred_region
      %s2961 = ssub.s32 128, 128
      %2962 = vsyncadd [#allocation4], %s2961
      %s2963 = sshll.u32 [#allocation10], 4
      %s2964 = int_to_ptr.vmem [resolvable:$true] %s2963
      %2969 = dma.vmem_to_hbm [thread:$0]  %s2964, 128, %s7, [#allocation4], 64, 64, 4
    $region49: #{tpu_custom_call.1} parent=1 // pred_fallthru
      _
    // Predicated region
    $region50: #{tpu_custom_call.1} parent=1 // pred_check
      _
    $region51: #{tpu_custom_call.1} parent=1 // pred_check_branch
      %2971 = sbr.rel (0) target = $region53
    $region52: #{tpu_custom_call.1} parent=1 // pred_region
      %2972 = dma.done [#allocation4], 128
    $region53: #{tpu_custom_call.1} parent=1 // pred_fallthru
      _
    %2973 = vsyncpa [#allocation3], 1
    %2974 = vsyncpa [#allocation6], 1
    %2975 = vsyncpa [#allocation9], 1
    %2976 = vsyncpa [#allocation4], 1

</llo_original>
